<compile_context>
chip_gen: v7x
topology: tpu7x:2x2x1
jax: 0.10.0
libtpu: 0.0.40
codegen_flags: <defaults>
</compile_context>

<pallas_src>
import math

import jax
import jax.numpy as jnp
import numpy as np
from jax.experimental import pallas as pl
from jax.experimental.pallas import tpu as pltpu

D_MODEL = 32
NHEAD = 4
D_FF = 64
BATCH = 2
SEQ = 8
LN_EPS = 1e-5
D_K = D_MODEL // NHEAD            # 8
N_ROWS = BATCH * SEQ              # 16
HH = NHEAD * NHEAD                # 16  score pairs (h, e)
DE = HH * D_K                     # 128 expanded Q/K/V lane width: (h*H+e)*dk+d
DG = NHEAD * D_MODEL              # 128 regroup lane width:        c*D + h*dk+d
R_GRP = SEQ // NHEAD              # 2   rows per head after transpose(1,2).view
NEG_INF = -1000000000.0


# ---------------------------- fused Pallas kernel ----------------------------

def _layer_norm(y, g, b):
    mu = jnp.mean(y, axis=-1, keepdims=True)
    c = y - mu
    var = jnp.mean(c * c, axis=-1, keepdims=True)
    return c * jax.lax.rsqrt(var + LN_EPS) * g + b


def _attention_core(q_exp, k_exp, v_exp, mask_row, rr, bc, ga, hsel, wo_exp, bo):
    """Reference `attention` + transpose(1,2).view regroup + output projection.

    q_exp/k_exp/v_exp: (S, DE) lane-expanded projections (expansion folded into
        the weights at init): column (h*H+e)*dk+d holds q[.,h,d] / k[.,e,d] /
        v[.,e,d].
    mask_row: (1, HH) with column h*H+e = mask[0, h, e].
    rr/bc/ga/hsel/wo_exp: constant matrices (see pack_params).
    Returns the projected attention output for batch 0: (S, D).
    """
    # scores[s, h*H+e] = sum_d q[s,h,d]*k[s,e,d] / sqrt(dk)   (scale folded in rr)
    prod = q_exp * k_exp                                             # (S, DE)
    s = jnp.dot(prod, rr, preferred_element_type=jnp.float32)        # (S, HH)
    mask_b = jnp.broadcast_to(mask_row, s.shape)
    s = jnp.where(mask_b == 0.0, NEG_INF, s)                         # masked_fill
    # attn[s, h*dk+d] = sum_e scores[s,h,e] * v[s,e,d]   (no softmax: faithful)
    s_exp = jnp.dot(s, bc, preferred_element_type=jnp.float32)       # (S, DE)
    a = jnp.dot(s_exp * v_exp, ga, preferred_element_type=jnp.float32)  # (S, D)

    # transpose(1,2).contiguous().view(B,-1,H*dk) regroup, folded into an
    # expanded Wo:  out[m, j] = sum_{c,d} a[(m%R)*H + c, (m//R)*dk + d] * Wo[c*dk+d, j]
    grp_rows = [
        jnp.concatenate(
            [a[aa * NHEAD + c: aa * NHEAD + c + 1, :] for c in range(NHEAD)],
            axis=1)                                                  # (1, DG)
        for aa in range(R_GRP)
    ]
    pair = jnp.concatenate(grp_rows, axis=0)                         # (R, DG)
    regrouped = jnp.concatenate([pair] * NHEAD, axis=0) * hsel       # (S, DG)
    return jnp.dot(regrouped, wo_exp, preferred_element_type=jnp.float32) + bo


def _decoder_layer_kernel(
        x_ref, mem0_ref, msa_ref, mca_ref,
        wqkv_sa_ref, bqkv_sa_ref, wo_sa_ref, bo_sa_ref,
        wq_ca_ref, bq_ca_ref, wkv_ca_ref, bkv_ca_ref, wo_ca_ref, bo_ca_ref,
        rr_ref, bc_ref, ga_ref, hsel_ref,
        w1_ref, b1_ref, w2_ref, b2_ref,
        g1_ref, be1_ref, g2_ref, be2_ref, g3_ref, be3_ref,
        o_ref):
    x0 = x_ref[...].astype(jnp.float32)                 # (N, D)
    x0_b0 = x0[0:SEQ, :]                                # (S, D) batch-0 rows
    mem0 = mem0_ref[...].astype(jnp.float32)            # (S, D) batch-0 memory
    rr = rr_ref[...]
    bc = bc_ref[...]
    ga = ga_ref[...]
    hsel = hsel_ref[...]

    # ------------------------------ self attention ------------------------------
    # (only batch 0 of the MHA output is consumed: the module indexes it with [0])
    qkv = jnp.dot(x0_b0, wqkv_sa_ref[...],
                  preferred_element_type=jnp.float32) + bqkv_sa_ref[...]
    attn_sa = _attention_core(qkv[:, 0:DE], qkv[:, DE:2 * DE], qkv[:, 2 * DE:3 * DE],
                              msa_ref[...], rr, bc, ga, hsel,
                              wo_sa_ref[...], bo_sa_ref[...])        # (S, D)
    x1 = _layer_norm(x0 + jnp.concatenate([attn_sa] * BATCH, axis=0),
                     g1_ref[...], be1_ref[...])

    # --------------------------- cross (src) attention ---------------------------
    q_ca = jnp.dot(x1[0:SEQ, :], wq_ca_ref[...],
                   preferred_element_type=jnp.float32) + bq_ca_ref[...]
    kv = jnp.dot(mem0, wkv_ca_ref[...],
                 preferred_element_type=jnp.float32) + bkv_ca_ref[...]
    attn_ca = _attention_core(q_ca, kv[:, 0:DE], kv[:, DE:2 * DE],
                              mca_ref[...], rr, bc, ga, hsel,
                              wo_ca_ref[...], bo_ca_ref[...])        # (S, D)
    x2 = _layer_norm(x1 + jnp.concatenate([attn_ca] * BATCH, axis=0),
                     g2_ref[...], be2_ref[...])

    # -------------------------------- feed forward --------------------------------
    hid = jnp.maximum(
        jnp.dot(x2, w1_ref[...], preferred_element_type=jnp.float32) + b1_ref[...],
        0.0)
    t2 = jnp.dot(hid, w2_ref[...], preferred_element_type=jnp.float32) + b2_ref[...]
    x3 = _layer_norm(x2 + t2, g3_ref[...], be3_ref[...])

    o_ref[...] = x3.astype(o_ref.dtype)


# ------------------------ one-time parameter packing ------------------------

def _attention_constants():
    H, dk, D, S = NHEAD, D_K, D_MODEL, SEQ
    scale = 1.0 / math.sqrt(dk)
    q_idx = np.zeros((DE,), np.int32)       # Q lane expansion
    k_idx = np.zeros((DE,), np.int32)       # K / V lane expansion
    rr = np.zeros((DE, HH), np.float32)     # per-(h,e) dk reduction (+ scale)
    bc = np.zeros((HH, DE), np.float32)     # broadcast score over its dk lanes
    ga = np.zeros((DE, D), np.float32)      # sum over e into head block h
    for h in range(H):
        for e in range(H):
            p = h * H + e
            for d in range(dk):
                q_idx[p * dk + d] = h * dk + d
                k_idx[p * dk + d] = e * dk + d
                rr[p * dk + d, p] = scale
                bc[p, p * dk + d] = 1.0
                ga[p * dk + d, h * dk + d] = 1.0
    wo_row_idx = np.zeros((DG,), np.int32)  # expanded Wo row gather
    for c in range(H):
        for h in range(H):
            for d in range(dk):
                wo_row_idx[c * D + h * dk + d] = c * dk + d
    hsel = np.zeros((S, DG), np.float32)    # keep only head m//R per output row
    for m in range(S):
        h = m // R_GRP
        for c in range(H):
            hsel[m, c * D + h * dk: c * D + (h + 1) * dk] = 1.0
    return q_idx, k_idx, rr, bc, ga, wo_row_idx, hsel


def pack_params(params):
    """Pack/expand all weights once (outside the jitted per-step path)."""
    q_idx, k_idx, rr, bc, ga, wo_row_idx, hsel = _attention_constants()
    p_sa, p_ca = params["self_attn"], params["src_attn"]

    def row(v):
        return jnp.asarray(v).reshape(1, -1)

    def expand(p):
        return (p["wq"][:, q_idx], p["bq"][q_idx],
                p["wk"][:, k_idx], p["bk"][k_idx],
                p["wv"][:, k_idx], p["bv"][k_idx])

    wq_s, bq_s, wk_s, bk_s, wv_s, bv_s = expand(p_sa)
    wq_c, bq_c, wk_c, bk_c, wv_c, bv_c = expand(p_ca)

    return dict(
        w_sa_qkv=jnp.concatenate([wq_s, wk_s, wv_s], axis=1),        # (D, 3*DE)
        b_sa_qkv=row(jnp.concatenate([bq_s, bk_s, bv_s])),
        wo_sa=p_sa["wo"][wo_row_idx, :], bo_sa=row(p_sa["bo"]),      # (DG, D)
        wq_ca=wq_c, bq_ca=row(bq_c),                                 # (D, DE)
        w_ca_kv=jnp.concatenate([wk_c, wv_c], axis=1),               # (D, 2*DE)
        b_ca_kv=row(jnp.concatenate([bk_c, bv_c])),
        wo_ca=p_ca["wo"][wo_row_idx, :], bo_ca=row(p_ca["bo"]),
        rr=jnp.asarray(rr), bc=jnp.asarray(bc), ga=jnp.asarray(ga),
        hsel=jnp.asarray(hsel),
        w1=params["w1"], b1=row(params["b1"]),
        w2=params["w2"], b2=row(params["b2"]),
        ln1_g=row(params["ln1_g"]), ln1_b=row(params["ln1_b"]),
        ln2_g=row(params["ln2_g"]), ln2_b=row(params["ln2_b"]),
        ln3_g=row(params["ln3_g"]), ln3_b=row(params["ln3_b"]),
    )


# --------------------------------- model glue ---------------------------------

def decoder_layer(packed, tgt, memory, tgt_mask, memory_mask):
    B, S, D = tgt.shape
    assert (B, S, D) == (BATCH, SEQ, D_MODEL)

    inputs = (
        tgt.reshape(B * S, D),
        memory[0],                                         # only batch-0 K/V feed [0]
        tgt_mask[0].reshape(1, HH).astype(jnp.float32),
        memory_mask[0].reshape(1, HH).astype(jnp.float32),
        packed["w_sa_qkv"], packed["b_sa_qkv"], packed["wo_sa"], packed["bo_sa"],
        packed["wq_ca"], packed["bq_ca"], packed["w_ca_kv"], packed["b_ca_kv"],
        packed["wo_ca"], packed["bo_ca"],
        packed["rr"], packed["bc"], packed["ga"], packed["hsel"],
        packed["w1"], packed["b1"], packed["w2"], packed["b2"],
        packed["ln1_g"], packed["ln1_b"], packed["ln2_g"], packed["ln2_b"],
        packed["ln3_g"], packed["ln3_b"],
    )
    in_specs = [pl.BlockSpec(x.shape, lambda i: (0, 0)) for x in inputs]

    out = pl.pallas_call(
        _decoder_layer_kernel,
        out_shape=jax.ShapeDtypeStruct((B * S, D), tgt.dtype),
        grid_spec=pltpu.PrefetchScalarGridSpec(
            num_scalar_prefetch=0,
            grid=(1,),
            in_specs=in_specs,
            out_specs=pl.BlockSpec((B * S, D), lambda i: (0, 0)),
        ),
        compiler_params=pltpu.CompilerParams(
            dimension_semantics=("arbitrary",)),
    )(*inputs)
    return out.reshape(B, S, D)


# ---------------------------- deterministic params ----------------------------

def _init_linear(key, din, dout):
    kw, kb = jax.random.split(key)
    lim = 1.0 / math.sqrt(din)
    w = jax.random.uniform(kw, (din, dout), jnp.float32, -lim, lim)
    b = jax.random.uniform(kb, (dout,), jnp.float32, -lim, lim)
    return w, b


def _init_mha(key, d_model):
    p = {}
    for name, kk in zip(("q", "k", "v", "o"), jax.random.split(key, 4)):
        w, b = _init_linear(kk, d_model, d_model)
        p["w" + name] = w
        p["b" + name] = b
    return p


def init_params(key):
    k_sa, k_ca, k1, k2 = jax.random.split(key, 4)
    p = {"self_attn": _init_mha(k_sa, D_MODEL),
         "src_attn": _init_mha(k_ca, D_MODEL)}
    p["w1"], p["b1"] = _init_linear(k1, D_MODEL, D_FF)
    p["w2"], p["b2"] = _init_linear(k2, D_FF, D_MODEL)
    for i in (1, 2, 3):
        p[f"ln{i}_g"] = jnp.ones((D_MODEL,), jnp.float32)
        p[f"ln{i}_b"] = jnp.zeros((D_MODEL,), jnp.float32)
    return p


# ----------------------------- pure-JAX reference -----------------------------

def reference(params, tgt, memory, tgt_mask, memory_mask):
    def lin(x, w, b):
        return x @ w + b

    def ln(y, g, b):
        mu = y.mean(-1, keepdims=True)
        var = ((y - mu) ** 2).mean(-1, keepdims=True)
        return (y - mu) / jnp.sqrt(var + LN_EPS) * g + b

    def mha_ref(p, q_in, k_in, v_in, mask):
        B, S, D = q_in.shape
        H, dk = NHEAD, D // NHEAD
        q = lin(q_in, p["wq"], p["bq"]).reshape(B, -1, H, dk)
        k = lin(k_in, p["wk"], p["bk"]).reshape(B, -1, H, dk)
        v = lin(v_in, p["wv"], p["bv"]).reshape(B, -1, H, dk)
        scores = jnp.einsum("bshd,bsed->bshe", q, k) / math.sqrt(dk)
        scores = jnp.where(mask[:, None] == 0, NEG_INF, scores)
        x = jnp.einsum("bshe,bsed->bshd", scores, v)
        x = jnp.transpose(x, (0, 2, 1, 3)).reshape(B, S, H * dk)
        return lin(x, p["wo"], p["bo"])

    t2 = mha_ref(params["self_attn"], tgt, tgt, tgt, tgt_mask)
    x = ln(tgt + t2[0], params["ln1_g"], params["ln1_b"])
    t2 = mha_ref(params["src_attn"], x, memory, memory, memory_mask)
    x = ln(x + t2[0], params["ln2_g"], params["ln2_b"])
    t2 = lin(jnp.maximum(lin(x, params["w1"], params["b1"]), 0.0),
             params["w2"], params["b2"])
    return ln(x + t2, params["ln3_g"], params["ln3_b"])


if __name__ == "__main__":
    key = jax.random.PRNGKey(0)
    k_tgt, k_mem, k_params = jax.random.split(key, 3)
    tgt = jax.random.normal(k_tgt, (BATCH, SEQ, D_MODEL), jnp.float32)
    memory = jax.random.normal(k_mem, (BATCH, SEQ, D_MODEL), jnp.float32)
    # Masks broadcast against the (nhead x nhead) scores this module actually
    # produces; all-ones => nothing masked (the masked_fill path still runs).
    tgt_mask = jnp.ones((BATCH, NHEAD, NHEAD), jnp.float32)
    memory_mask = jnp.ones((BATCH, NHEAD, NHEAD), jnp.float32)

    params = init_params(k_params)
    packed = pack_params(params)          # one-time packing, hoisted out of jit

    fwd = jax.jit(decoder_layer)
    out = jax.block_until_ready(fwd(packed, tgt, memory, tgt_mask, memory_mask))

    ref = reference(params, tgt, memory, tgt_mask, memory_mask)
    assert out.shape == (BATCH, SEQ, D_MODEL)
    np.testing.assert_allclose(np.asarray(out), np.asarray(ref),
                               atol=1e-3, rtol=1e-3)
    print("KERNEL_OK")
</pallas_src>

<mosaic_0001>
module attributes {stable_mosaic.version = 11 : i64} {
  func.func @_decoder_layer_kernel(%arg0: i32, %arg1: memref<16x32xf32, #tpu.memory_space<vmem>>, %arg2: memref<8x32xf32, #tpu.memory_space<vmem>>, %arg3: memref<1x16xf32, #tpu.memory_space<vmem>>, %arg4: memref<1x16xf32, #tpu.memory_space<vmem>>, %arg5: memref<32x384xf32, #tpu.memory_space<vmem>>, %arg6: memref<1x384xf32, #tpu.memory_space<vmem>>, %arg7: memref<128x32xf32, #tpu.memory_space<vmem>>, %arg8: memref<1x32xf32, #tpu.memory_space<vmem>>, %arg9: memref<32x128xf32, #tpu.memory_space<vmem>>, %arg10: memref<1x128xf32, #tpu.memory_space<vmem>>, %arg11: memref<32x256xf32, #tpu.memory_space<vmem>>, %arg12: memref<1x256xf32, #tpu.memory_space<vmem>>, %arg13: memref<128x32xf32, #tpu.memory_space<vmem>>, %arg14: memref<1x32xf32, #tpu.memory_space<vmem>>, %arg15: memref<128x16xf32, #tpu.memory_space<vmem>>, %arg16: memref<16x128xf32, #tpu.memory_space<vmem>>, %arg17: memref<128x32xf32, #tpu.memory_space<vmem>>, %arg18: memref<8x128xf32, #tpu.memory_space<vmem>>, %arg19: memref<32x64xf32, #tpu.memory_space<vmem>>, %arg20: memref<1x64xf32, #tpu.memory_space<vmem>>, %arg21: memref<64x32xf32, #tpu.memory_space<vmem>>, %arg22: memref<1x32xf32, #tpu.memory_space<vmem>>, %arg23: memref<1x32xf32, #tpu.memory_space<vmem>>, %arg24: memref<1x32xf32, #tpu.memory_space<vmem>>, %arg25: memref<1x32xf32, #tpu.memory_space<vmem>>, %arg26: memref<1x32xf32, #tpu.memory_space<vmem>>, %arg27: memref<1x32xf32, #tpu.memory_space<vmem>>, %arg28: memref<1x32xf32, #tpu.memory_space<vmem>>, %arg29: memref<16x32xf32, #tpu.memory_space<vmem>>) attributes {dimension_semantics = [#tpu.dimension_semantics<arbitrary>], iteration_bounds = array<i64: 1>, scalar_prefetch = 0 : i64, scratch_operands = 0 : i64, tpu.core_type = #tpu.core_type<tc>, window_params = [{pipeline_mode = #tpu.pipeline_mode<synchronous>, transform_indices = @transform_0, window_bounds = array<i64: 16, 32>}, {pipeline_mode = #tpu.pipeline_mode<synchronous>, transform_indices = @transform_1, window_bounds = array<i64: 8, 32>}, {pipeline_mode = #tpu.pipeline_mode<synchronous>, transform_indices = @transform_2, window_bounds = array<i64: 1, 16>}, {pipeline_mode = #tpu.pipeline_mode<synchronous>, transform_indices = @transform_3, window_bounds = array<i64: 1, 16>}, {pipeline_mode = #tpu.pipeline_mode<synchronous>, transform_indices = @transform_4, window_bounds = array<i64: 32, 384>}, {pipeline_mode = #tpu.pipeline_mode<synchronous>, transform_indices = @transform_5, window_bounds = array<i64: 1, 384>}, {pipeline_mode = #tpu.pipeline_mode<synchronous>, transform_indices = @transform_6, window_bounds = array<i64: 128, 32>}, {pipeline_mode = #tpu.pipeline_mode<synchronous>, transform_indices = @transform_7, window_bounds = array<i64: 1, 32>}, {pipeline_mode = #tpu.pipeline_mode<synchronous>, transform_indices = @transform_8, window_bounds = array<i64: 32, 128>}, {pipeline_mode = #tpu.pipeline_mode<synchronous>, transform_indices = @transform_9, window_bounds = array<i64: 1, 128>}, {pipeline_mode = #tpu.pipeline_mode<synchronous>, transform_indices = @transform_10, window_bounds = array<i64: 32, 256>}, {pipeline_mode = #tpu.pipeline_mode<synchronous>, transform_indices = @transform_11, window_bounds = array<i64: 1, 256>}, {pipeline_mode = #tpu.pipeline_mode<synchronous>, transform_indices = @transform_12, window_bounds = array<i64: 128, 32>}, {pipeline_mode = #tpu.pipeline_mode<synchronous>, transform_indices = @transform_13, window_bounds = array<i64: 1, 32>}, {pipeline_mode = #tpu.pipeline_mode<synchronous>, transform_indices = @transform_14, window_bounds = array<i64: 128, 16>}, {pipeline_mode = #tpu.pipeline_mode<synchronous>, transform_indices = @transform_15, window_bounds = array<i64: 16, 128>}, {pipeline_mode = #tpu.pipeline_mode<synchronous>, transform_indices = @transform_16, window_bounds = array<i64: 128, 32>}, {pipeline_mode = #tpu.pipeline_mode<synchronous>, transform_indices = @transform_17, window_bounds = array<i64: 8, 128>}, {pipeline_mode = #tpu.pipeline_mode<synchronous>, transform_indices = @transform_18, window_bounds = array<i64: 32, 64>}, {pipeline_mode = #tpu.pipeline_mode<synchronous>, transform_indices = @transform_19, window_bounds = array<i64: 1, 64>}, {pipeline_mode = #tpu.pipeline_mode<synchronous>, transform_indices = @transform_20, window_bounds = array<i64: 64, 32>}, {pipeline_mode = #tpu.pipeline_mode<synchronous>, transform_indices = @transform_21, window_bounds = array<i64: 1, 32>}, {pipeline_mode = #tpu.pipeline_mode<synchronous>, transform_indices = @transform_22, window_bounds = array<i64: 1, 32>}, {pipeline_mode = #tpu.pipeline_mode<synchronous>, transform_indices = @transform_23, window_bounds = array<i64: 1, 32>}, {pipeline_mode = #tpu.pipeline_mode<synchronous>, transform_indices = @transform_24, window_bounds = array<i64: 1, 32>}, {pipeline_mode = #tpu.pipeline_mode<synchronous>, transform_indices = @transform_25, window_bounds = array<i64: 1, 32>}, {pipeline_mode = #tpu.pipeline_mode<synchronous>, transform_indices = @transform_26, window_bounds = array<i64: 1, 32>}, {pipeline_mode = #tpu.pipeline_mode<synchronous>, transform_indices = @transform_27, window_bounds = array<i64: 1, 32>}, {pipeline_mode = #tpu.pipeline_mode<synchronous>, transform_indices = @transform_28, window_bounds = array<i64: 16, 32>}]} {
    %c0 = arith.constant 0 : index
    %c0_0 = arith.constant 0 : index
    %0 = vector.load %arg1[%c0, %c0_0] : memref<16x32xf32, #tpu.memory_space<vmem>>, vector<16x32xf32>
    %1 = vector.extract_strided_slice %0 {offsets = [0, 0], sizes = [8, 32], strides = [1, 1]} : vector<16x32xf32> to vector<8x32xf32>
    %c0_1 = arith.constant 0 : index
    %c0_2 = arith.constant 0 : index
    %2 = vector.load %arg2[%c0_1, %c0_2] : memref<8x32xf32, #tpu.memory_space<vmem>>, vector<8x32xf32>
    %c0_3 = arith.constant 0 : index
    %c0_4 = arith.constant 0 : index
    %3 = vector.load %arg15[%c0_3, %c0_4] : memref<128x16xf32, #tpu.memory_space<vmem>>, vector<128x16xf32>
    %c0_5 = arith.constant 0 : index
    %c0_6 = arith.constant 0 : index
    %4 = vector.load %arg16[%c0_5, %c0_6] : memref<16x128xf32, #tpu.memory_space<vmem>>, vector<16x128xf32>
    %c0_7 = arith.constant 0 : index
    %c0_8 = arith.constant 0 : index
    %5 = vector.load %arg17[%c0_7, %c0_8] : memref<128x32xf32, #tpu.memory_space<vmem>>, vector<128x32xf32>
    %c0_9 = arith.constant 0 : index
    %c0_10 = arith.constant 0 : index
    %6 = vector.load %arg18[%c0_9, %c0_10] : memref<8x128xf32, #tpu.memory_space<vmem>>, vector<8x128xf32>
    %c0_11 = arith.constant 0 : index
    %c0_12 = arith.constant 0 : index
    %7 = vector.load %arg5[%c0_11, %c0_12] : memref<32x384xf32, #tpu.memory_space<vmem>>, vector<32x384xf32>
    %cst = arith.constant dense<0.000000e+00> : vector<8x384xf32>
    %8 = tpu.matmul %1, %7, %cst {dimension_numbers = #tpu.dot_dimension_numbers<[1], [0], [0], [1], [0, 0, 1, 1], [], []>} : vector<8x32xf32>, vector<32x384xf32>, vector<8x384xf32> -> vector<8x384xf32>
    %c0_13 = arith.constant 0 : index
    %c0_14 = arith.constant 0 : index
    %9 = vector.load %arg6[%c0_13, %c0_14] : memref<1x384xf32, #tpu.memory_space<vmem>>, vector<1x384xf32>
    %10 = vector.broadcast %9 : vector<1x384xf32> to vector<8x384xf32>
    %11 = arith.addf %8, %10 : vector<8x384xf32>
    %12 = vector.extract_strided_slice %11 {offsets = [0, 0], sizes = [8, 128], strides = [1, 1]} : vector<8x384xf32> to vector<8x128xf32>
    %13 = vector.extract_strided_slice %11 {offsets = [0, 128], sizes = [8, 128], strides = [1, 1]} : vector<8x384xf32> to vector<8x128xf32>
    %14 = vector.extract_strided_slice %11 {offsets = [0, 256], sizes = [8, 128], strides = [1, 1]} : vector<8x384xf32> to vector<8x128xf32>
    %c0_15 = arith.constant 0 : index
    %c0_16 = arith.constant 0 : index
    %15 = vector.load %arg3[%c0_15, %c0_16] : memref<1x16xf32, #tpu.memory_space<vmem>>, vector<1x16xf32>
    %c0_17 = arith.constant 0 : index
    %c0_18 = arith.constant 0 : index
    %16 = vector.load %arg7[%c0_17, %c0_18] : memref<128x32xf32, #tpu.memory_space<vmem>>, vector<128x32xf32>
    %c0_19 = arith.constant 0 : index
    %c0_20 = arith.constant 0 : index
    %17 = vector.load %arg8[%c0_19, %c0_20] : memref<1x32xf32, #tpu.memory_space<vmem>>, vector<1x32xf32>
    %18 = arith.mulf %12, %13 : vector<8x128xf32>
    %cst_21 = arith.constant dense<0.000000e+00> : vector<8x16xf32>
    %19 = tpu.matmul %18, %3, %cst_21 {dimension_numbers = #tpu.dot_dimension_numbers<[1], [0], [0], [1], [0, 0, 1, 1], [], []>} : vector<8x128xf32>, vector<128x16xf32>, vector<8x16xf32> -> vector<8x16xf32>
    %20 = vector.shape_cast %15 : vector<1x16xf32> to vector<1x16xf32>
    %21 = vector.broadcast %20 : vector<1x16xf32> to vector<8x16xf32>
    %cst_22 = arith.constant 0.000000e+00 : f32
    %22 = vector.broadcast %cst_22 : f32 to vector<8x16xf32>
    %23 = arith.cmpf oeq, %21, %22 : vector<8x16xf32>
    %cst_23 = arith.constant -1.000000e+09 : f32
    %24 = vector.broadcast %cst_23 : f32 to vector<8x16xf32>
    %25 = arith.select %23, %24, %19 : vector<8x16xi1>, vector<8x16xf32>
    %cst_24 = arith.constant dense<0.000000e+00> : vector<8x128xf32>
    %26 = tpu.matmul %25, %4, %cst_24 {dimension_numbers = #tpu.dot_dimension_numbers<[1], [0], [0], [1], [0, 0, 1, 1], [], []>} : vector<8x16xf32>, vector<16x128xf32>, vector<8x128xf32> -> vector<8x128xf32>
    %27 = arith.mulf %26, %14 : vector<8x128xf32>
    %cst_25 = arith.constant dense<0.000000e+00> : vector<8x32xf32>
    %28 = tpu.matmul %27, %5, %cst_25 {dimension_numbers = #tpu.dot_dimension_numbers<[1], [0], [0], [1], [0, 0, 1, 1], [], []>} : vector<8x128xf32>, vector<128x32xf32>, vector<8x32xf32> -> vector<8x32xf32>
    %29 = vector.extract_strided_slice %28 {offsets = [0, 0], sizes = [1, 32], strides = [1, 1]} : vector<8x32xf32> to vector<1x32xf32>
    %30 = vector.extract_strided_slice %28 {offsets = [1, 0], sizes = [1, 32], strides = [1, 1]} : vector<8x32xf32> to vector<1x32xf32>
    %31 = vector.extract_strided_slice %28 {offsets = [2, 0], sizes = [1, 32], strides = [1, 1]} : vector<8x32xf32> to vector<1x32xf32>
    %32 = vector.extract_strided_slice %28 {offsets = [3, 0], sizes = [1, 32], strides = [1, 1]} : vector<8x32xf32> to vector<1x32xf32>
    %33 = tpu.concatenate %29, %30, %31, %32 in 1 : vector<1x32xf32>, vector<1x32xf32>, vector<1x32xf32>, vector<1x32xf32> -> vector<1x128xf32>
    %34 = vector.extract_strided_slice %28 {offsets = [4, 0], sizes = [1, 32], strides = [1, 1]} : vector<8x32xf32> to vector<1x32xf32>
    %35 = vector.extract_strided_slice %28 {offsets = [5, 0], sizes = [1, 32], strides = [1, 1]} : vector<8x32xf32> to vector<1x32xf32>
    %36 = vector.extract_strided_slice %28 {offsets = [6, 0], sizes = [1, 32], strides = [1, 1]} : vector<8x32xf32> to vector<1x32xf32>
    %37 = vector.extract_strided_slice %28 {offsets = [7, 0], sizes = [1, 32], strides = [1, 1]} : vector<8x32xf32> to vector<1x32xf32>
    %38 = tpu.concatenate %34, %35, %36, %37 in 1 : vector<1x32xf32>, vector<1x32xf32>, vector<1x32xf32>, vector<1x32xf32> -> vector<1x128xf32>
    %39 = tpu.concatenate %33, %38 in 0 : vector<1x128xf32>, vector<1x128xf32> -> vector<2x128xf32>
    %40 = tpu.concatenate %39, %39, %39, %39 in 0 : vector<2x128xf32>, vector<2x128xf32>, vector<2x128xf32>, vector<2x128xf32> -> vector<8x128xf32>
    %41 = arith.mulf %40, %6 : vector<8x128xf32>
    %cst_26 = arith.constant dense<0.000000e+00> : vector<8x32xf32>
    %42 = tpu.matmul %41, %16, %cst_26 {dimension_numbers = #tpu.dot_dimension_numbers<[1], [0], [0], [1], [0, 0, 1, 1], [], []>} : vector<8x128xf32>, vector<128x32xf32>, vector<8x32xf32> -> vector<8x32xf32>
    %43 = vector.broadcast %17 : vector<1x32xf32> to vector<8x32xf32>
    %44 = arith.addf %42, %43 : vector<8x32xf32>
    %45 = tpu.concatenate %44, %44 in 0 : vector<8x32xf32>, vector<8x32xf32> -> vector<16x32xf32>
    %46 = arith.addf %0, %45 : vector<16x32xf32>
    %c0_27 = arith.constant 0 : index
    %c0_28 = arith.constant 0 : index
    %47 = vector.load %arg23[%c0_27, %c0_28] : memref<1x32xf32, #tpu.memory_space<vmem>>, vector<1x32xf32>
    %c0_29 = arith.constant 0 : index
    %c0_30 = arith.constant 0 : index
    %48 = vector.load %arg24[%c0_29, %c0_30] : memref<1x32xf32, #tpu.memory_space<vmem>>, vector<1x32xf32>
    %cst_31 = arith.constant dense<0.000000e+00> : vector<16xf32>
    %49 = vector.multi_reduction <add>, %46, %cst_31 [1] : vector<16x32xf32> to vector<16xf32>
    %50 = vector.shape_cast %49 : vector<16xf32> to vector<16x1xf32>
    %cst_32 = arith.constant 3.200000e+01 : f32
    %51 = vector.broadcast %cst_32 : f32 to vector<16x1xf32>
    %52 = arith.divf %50, %51 : vector<16x1xf32>
    %53 = vector.broadcast %52 : vector<16x1xf32> to vector<16x32xf32>
    %54 = arith.subf %46, %53 : vector<16x32xf32>
    %55 = arith.mulf %54, %54 : vector<16x32xf32>
    %cst_33 = arith.constant dense<0.000000e+00> : vector<16xf32>
    %56 = vector.multi_reduction <add>, %55, %cst_33 [1] : vector<16x32xf32> to vector<16xf32>
    %57 = vector.shape_cast %56 : vector<16xf32> to vector<16x1xf32>
    %cst_34 = arith.constant 3.200000e+01 : f32
    %58 = vector.broadcast %cst_34 : f32 to vector<16x1xf32>
    %59 = arith.divf %57, %58 : vector<16x1xf32>
    %cst_35 = arith.constant 9.99999974E-6 : f32
    %60 = vector.broadcast %cst_35 : f32 to vector<16x1xf32>
    %61 = arith.addf %59, %60 : vector<16x1xf32>
    %62 = math.rsqrt %61 : vector<16x1xf32>
    %63 = vector.broadcast %62 : vector<16x1xf32> to vector<16x32xf32>
    %64 = arith.mulf %54, %63 : vector<16x32xf32>
    %65 = vector.broadcast %47 : vector<1x32xf32> to vector<16x32xf32>
    %66 = arith.mulf %64, %65 : vector<16x32xf32>
    %67 = vector.broadcast %48 : vector<1x32xf32> to vector<16x32xf32>
    %68 = arith.addf %66, %67 : vector<16x32xf32>
    %69 = vector.extract_strided_slice %68 {offsets = [0, 0], sizes = [8, 32], strides = [1, 1]} : vector<16x32xf32> to vector<8x32xf32>
    %c0_36 = arith.constant 0 : index
    %c0_37 = arith.constant 0 : index
    %70 = vector.load %arg9[%c0_36, %c0_37] : memref<32x128xf32, #tpu.memory_space<vmem>>, vector<32x128xf32>
    %cst_38 = arith.constant dense<0.000000e+00> : vector<8x128xf32>
    %71 = tpu.matmul %69, %70, %cst_38 {dimension_numbers = #tpu.dot_dimension_numbers<[1], [0], [0], [1], [0, 0, 1, 1], [], []>} : vector<8x32xf32>, vector<32x128xf32>, vector<8x128xf32> -> vector<8x128xf32>
    %c0_39 = arith.constant 0 : index
    %c0_40 = arith.constant 0 : index
    %72 = vector.load %arg10[%c0_39, %c0_40] : memref<1x128xf32, #tpu.memory_space<vmem>>, vector<1x128xf32>
    %73 = vector.broadcast %72 : vector<1x128xf32> to vector<8x128xf32>
    %74 = arith.addf %71, %73 : vector<8x128xf32>
    %c0_41 = arith.constant 0 : index
    %c0_42 = arith.constant 0 : index
    %75 = vector.load %arg11[%c0_41, %c0_42] : memref<32x256xf32, #tpu.memory_space<vmem>>, vector<32x256xf32>
    %cst_43 = arith.constant dense<0.000000e+00> : vector<8x256xf32>
    %76 = tpu.matmul %2, %75, %cst_43 {dimension_numbers = #tpu.dot_dimension_numbers<[1], [0], [0], [1], [0, 0, 1, 1], [], []>} : vector<8x32xf32>, vector<32x256xf32>, vector<8x256xf32> -> vector<8x256xf32>
    %c0_44 = arith.constant 0 : index
    %c0_45 = arith.constant 0 : index
    %77 = vector.load %arg12[%c0_44, %c0_45] : memref<1x256xf32, #tpu.memory_space<vmem>>, vector<1x256xf32>
    %78 = vector.broadcast %77 : vector<1x256xf32> to vector<8x256xf32>
    %79 = arith.addf %76, %78 : vector<8x256xf32>
    %80 = vector.extract_strided_slice %79 {offsets = [0, 0], sizes = [8, 128], strides = [1, 1]} : vector<8x256xf32> to vector<8x128xf32>
    %81 = vector.extract_strided_slice %79 {offsets = [0, 128], sizes = [8, 128], strides = [1, 1]} : vector<8x256xf32> to vector<8x128xf32>
    %c0_46 = arith.constant 0 : index
    %c0_47 = arith.constant 0 : index
    %82 = vector.load %arg4[%c0_46, %c0_47] : memref<1x16xf32, #tpu.memory_space<vmem>>, vector<1x16xf32>
    %c0_48 = arith.constant 0 : index
    %c0_49 = arith.constant 0 : index
    %83 = vector.load %arg13[%c0_48, %c0_49] : memref<128x32xf32, #tpu.memory_space<vmem>>, vector<128x32xf32>
    %c0_50 = arith.constant 0 : index
    %c0_51 = arith.constant 0 : index
    %84 = vector.load %arg14[%c0_50, %c0_51] : memref<1x32xf32, #tpu.memory_space<vmem>>, vector<1x32xf32>
    %85 = arith.mulf %74, %80 : vector<8x128xf32>
    %cst_52 = arith.constant dense<0.000000e+00> : vector<8x16xf32>
    %86 = tpu.matmul %85, %3, %cst_52 {dimension_numbers = #tpu.dot_dimension_numbers<[1], [0], [0], [1], [0, 0, 1, 1], [], []>} : vector<8x128xf32>, vector<128x16xf32>, vector<8x16xf32> -> vector<8x16xf32>
    %87 = vector.shape_cast %82 : vector<1x16xf32> to vector<1x16xf32>
    %88 = vector.broadcast %87 : vector<1x16xf32> to vector<8x16xf32>
    %cst_53 = arith.constant 0.000000e+00 : f32
    %89 = vector.broadcast %cst_53 : f32 to vector<8x16xf32>
    %90 = arith.cmpf oeq, %88, %89 : vector<8x16xf32>
    %cst_54 = arith.constant -1.000000e+09 : f32
    %91 = vector.broadcast %cst_54 : f32 to vector<8x16xf32>
    %92 = arith.select %90, %91, %86 : vector<8x16xi1>, vector<8x16xf32>
    %cst_55 = arith.constant dense<0.000000e+00> : vector<8x128xf32>
    %93 = tpu.matmul %92, %4, %cst_55 {dimension_numbers = #tpu.dot_dimension_numbers<[1], [0], [0], [1], [0, 0, 1, 1], [], []>} : vector<8x16xf32>, vector<16x128xf32>, vector<8x128xf32> -> vector<8x128xf32>
    %94 = arith.mulf %93, %81 : vector<8x128xf32>
    %cst_56 = arith.constant dense<0.000000e+00> : vector<8x32xf32>
    %95 = tpu.matmul %94, %5, %cst_56 {dimension_numbers = #tpu.dot_dimension_numbers<[1], [0], [0], [1], [0, 0, 1, 1], [], []>} : vector<8x128xf32>, vector<128x32xf32>, vector<8x32xf32> -> vector<8x32xf32>
    %96 = vector.extract_strided_slice %95 {offsets = [0, 0], sizes = [1, 32], strides = [1, 1]} : vector<8x32xf32> to vector<1x32xf32>
    %97 = vector.extract_strided_slice %95 {offsets = [1, 0], sizes = [1, 32], strides = [1, 1]} : vector<8x32xf32> to vector<1x32xf32>
    %98 = vector.extract_strided_slice %95 {offsets = [2, 0], sizes = [1, 32], strides = [1, 1]} : vector<8x32xf32> to vector<1x32xf32>
    %99 = vector.extract_strided_slice %95 {offsets = [3, 0], sizes = [1, 32], strides = [1, 1]} : vector<8x32xf32> to vector<1x32xf32>
    %100 = tpu.concatenate %96, %97, %98, %99 in 1 : vector<1x32xf32>, vector<1x32xf32>, vector<1x32xf32>, vector<1x32xf32> -> vector<1x128xf32>
    %101 = vector.extract_strided_slice %95 {offsets = [4, 0], sizes = [1, 32], strides = [1, 1]} : vector<8x32xf32> to vector<1x32xf32>
    %102 = vector.extract_strided_slice %95 {offsets = [5, 0], sizes = [1, 32], strides = [1, 1]} : vector<8x32xf32> to vector<1x32xf32>
    %103 = vector.extract_strided_slice %95 {offsets = [6, 0], sizes = [1, 32], strides = [1, 1]} : vector<8x32xf32> to vector<1x32xf32>
    %104 = vector.extract_strided_slice %95 {offsets = [7, 0], sizes = [1, 32], strides = [1, 1]} : vector<8x32xf32> to vector<1x32xf32>
    %105 = tpu.concatenate %101, %102, %103, %104 in 1 : vector<1x32xf32>, vector<1x32xf32>, vector<1x32xf32>, vector<1x32xf32> -> vector<1x128xf32>
    %106 = tpu.concatenate %100, %105 in 0 : vector<1x128xf32>, vector<1x128xf32> -> vector<2x128xf32>
    %107 = tpu.concatenate %106, %106, %106, %106 in 0 : vector<2x128xf32>, vector<2x128xf32>, vector<2x128xf32>, vector<2x128xf32> -> vector<8x128xf32>
    %108 = arith.mulf %107, %6 : vector<8x128xf32>
    %cst_57 = arith.constant dense<0.000000e+00> : vector<8x32xf32>
    %109 = tpu.matmul %108, %83, %cst_57 {dimension_numbers = #tpu.dot_dimension_numbers<[1], [0], [0], [1], [0, 0, 1, 1], [], []>} : vector<8x128xf32>, vector<128x32xf32>, vector<8x32xf32> -> vector<8x32xf32>
    %110 = vector.broadcast %84 : vector<1x32xf32> to vector<8x32xf32>
    %111 = arith.addf %109, %110 : vector<8x32xf32>
    %112 = tpu.concatenate %111, %111 in 0 : vector<8x32xf32>, vector<8x32xf32> -> vector<16x32xf32>
    %113 = arith.addf %68, %112 : vector<16x32xf32>
    %c0_58 = arith.constant 0 : index
    %c0_59 = arith.constant 0 : index
    %114 = vector.load %arg25[%c0_58, %c0_59] : memref<1x32xf32, #tpu.memory_space<vmem>>, vector<1x32xf32>
    %c0_60 = arith.constant 0 : index
    %c0_61 = arith.constant 0 : index
    %115 = vector.load %arg26[%c0_60, %c0_61] : memref<1x32xf32, #tpu.memory_space<vmem>>, vector<1x32xf32>
    %cst_62 = arith.constant dense<0.000000e+00> : vector<16xf32>
    %116 = vector.multi_reduction <add>, %113, %cst_62 [1] : vector<16x32xf32> to vector<16xf32>
    %117 = vector.shape_cast %116 : vector<16xf32> to vector<16x1xf32>
    %cst_63 = arith.constant 3.200000e+01 : f32
    %118 = vector.broadcast %cst_63 : f32 to vector<16x1xf32>
    %119 = arith.divf %117, %118 : vector<16x1xf32>
    %120 = vector.broadcast %119 : vector<16x1xf32> to vector<16x32xf32>
    %121 = arith.subf %113, %120 : vector<16x32xf32>
    %122 = arith.mulf %121, %121 : vector<16x32xf32>
    %cst_64 = arith.constant dense<0.000000e+00> : vector<16xf32>
    %123 = vector.multi_reduction <add>, %122, %cst_64 [1] : vector<16x32xf32> to vector<16xf32>
    %124 = vector.shape_cast %123 : vector<16xf32> to vector<16x1xf32>
    %cst_65 = arith.constant 3.200000e+01 : f32
    %125 = vector.broadcast %cst_65 : f32 to vector<16x1xf32>
    %126 = arith.divf %124, %125 : vector<16x1xf32>
    %cst_66 = arith.constant 9.99999974E-6 : f32
    %127 = vector.broadcast %cst_66 : f32 to vector<16x1xf32>
    %128 = arith.addf %126, %127 : vector<16x1xf32>
    %129 = math.rsqrt %128 : vector<16x1xf32>
    %130 = vector.broadcast %129 : vector<16x1xf32> to vector<16x32xf32>
    %131 = arith.mulf %121, %130 : vector<16x32xf32>
    %132 = vector.broadcast %114 : vector<1x32xf32> to vector<16x32xf32>
    %133 = arith.mulf %131, %132 : vector<16x32xf32>
    %134 = vector.broadcast %115 : vector<1x32xf32> to vector<16x32xf32>
    %135 = arith.addf %133, %134 : vector<16x32xf32>
    %c0_67 = arith.constant 0 : index
    %c0_68 = arith.constant 0 : index
    %136 = vector.load %arg19[%c0_67, %c0_68] : memref<32x64xf32, #tpu.memory_space<vmem>>, vector<32x64xf32>
    %cst_69 = arith.constant dense<0.000000e+00> : vector<16x64xf32>
    %137 = tpu.matmul %135, %136, %cst_69 {dimension_numbers = #tpu.dot_dimension_numbers<[1], [0], [0], [1], [0, 0, 1, 1], [], []>} : vector<16x32xf32>, vector<32x64xf32>, vector<16x64xf32> -> vector<16x64xf32>
    %c0_70 = arith.constant 0 : index
    %c0_71 = arith.constant 0 : index
    %138 = vector.load %arg20[%c0_70, %c0_71] : memref<1x64xf32, #tpu.memory_space<vmem>>, vector<1x64xf32>
    %139 = vector.broadcast %138 : vector<1x64xf32> to vector<16x64xf32>
    %140 = arith.addf %137, %139 : vector<16x64xf32>
    %cst_72 = arith.constant 0.000000e+00 : f32
    %141 = vector.broadcast %cst_72 : f32 to vector<16x64xf32>
    %142 = arith.maximumf %140, %141 : vector<16x64xf32>
    %c0_73 = arith.constant 0 : index
    %c0_74 = arith.constant 0 : index
    %143 = vector.load %arg21[%c0_73, %c0_74] : memref<64x32xf32, #tpu.memory_space<vmem>>, vector<64x32xf32>
    %cst_75 = arith.constant dense<0.000000e+00> : vector<16x32xf32>
    %144 = tpu.matmul %142, %143, %cst_75 {dimension_numbers = #tpu.dot_dimension_numbers<[1], [0], [0], [1], [0, 0, 1, 1], [], []>} : vector<16x64xf32>, vector<64x32xf32>, vector<16x32xf32> -> vector<16x32xf32>
    %c0_76 = arith.constant 0 : index
    %c0_77 = arith.constant 0 : index
    %145 = vector.load %arg22[%c0_76, %c0_77] : memref<1x32xf32, #tpu.memory_space<vmem>>, vector<1x32xf32>
    %146 = vector.broadcast %145 : vector<1x32xf32> to vector<16x32xf32>
    %147 = arith.addf %144, %146 : vector<16x32xf32>
    %148 = arith.addf %135, %147 : vector<16x32xf32>
    %c0_78 = arith.constant 0 : index
    %c0_79 = arith.constant 0 : index
    %149 = vector.load %arg27[%c0_78, %c0_79] : memref<1x32xf32, #tpu.memory_space<vmem>>, vector<1x32xf32>
    %c0_80 = arith.constant 0 : index
    %c0_81 = arith.constant 0 : index
    %150 = vector.load %arg28[%c0_80, %c0_81] : memref<1x32xf32, #tpu.memory_space<vmem>>, vector<1x32xf32>
    %cst_82 = arith.constant dense<0.000000e+00> : vector<16xf32>
    %151 = vector.multi_reduction <add>, %148, %cst_82 [1] : vector<16x32xf32> to vector<16xf32>
    %152 = vector.shape_cast %151 : vector<16xf32> to vector<16x1xf32>
    %cst_83 = arith.constant 3.200000e+01 : f32
    %153 = vector.broadcast %cst_83 : f32 to vector<16x1xf32>
    %154 = arith.divf %152, %153 : vector<16x1xf32>
    %155 = vector.broadcast %154 : vector<16x1xf32> to vector<16x32xf32>
    %156 = arith.subf %148, %155 : vector<16x32xf32>
    %157 = arith.mulf %156, %156 : vector<16x32xf32>
    %cst_84 = arith.constant dense<0.000000e+00> : vector<16xf32>
    %158 = vector.multi_reduction <add>, %157, %cst_84 [1] : vector<16x32xf32> to vector<16xf32>
    %159 = vector.shape_cast %158 : vector<16xf32> to vector<16x1xf32>
    %cst_85 = arith.constant 3.200000e+01 : f32
    %160 = vector.broadcast %cst_85 : f32 to vector<16x1xf32>
    %161 = arith.divf %159, %160 : vector<16x1xf32>
    %cst_86 = arith.constant 9.99999974E-6 : f32
    %162 = vector.broadcast %cst_86 : f32 to vector<16x1xf32>
    %163 = arith.addf %161, %162 : vector<16x1xf32>
    %164 = math.rsqrt %163 : vector<16x1xf32>
    %165 = vector.broadcast %164 : vector<16x1xf32> to vector<16x32xf32>
    %166 = arith.mulf %156, %165 : vector<16x32xf32>
    %167 = vector.broadcast %149 : vector<1x32xf32> to vector<16x32xf32>
    %168 = arith.mulf %166, %167 : vector<16x32xf32>
    %169 = vector.broadcast %150 : vector<1x32xf32> to vector<16x32xf32>
    %170 = arith.addf %168, %169 : vector<16x32xf32>
    %c0_87 = arith.constant 0 : index
    %c0_88 = arith.constant 0 : index
    %171 = vector.load %arg29[%c0_87, %c0_88] : memref<16x32xf32, #tpu.memory_space<vmem>>, vector<16x32xf32>
    tpu.vector_store %arg29[%c0_87, %c0_88], %170 {strides = array<i32>} : memref<16x32xf32, #tpu.memory_space<vmem>>, vector<16x32xf32>,
    return
  }
  func.func @transform_0(%arg0: i32) -> (i32, i32) {
    %c0_i32 = arith.constant 0 : i32
    %c0_i32_0 = arith.constant 0 : i32
    %c0_i32_1 = arith.constant 0 : i32
    return %c0_i32, %c0_i32_0 : i32, i32
  }
  func.func @transform_1(%arg0: i32) -> (i32, i32) {
    %c0_i32 = arith.constant 0 : i32
    %c0_i32_0 = arith.constant 0 : i32
    %c0_i32_1 = arith.constant 0 : i32
    return %c0_i32, %c0_i32_0 : i32, i32
  }
  func.func @transform_2(%arg0: i32) -> (i32, i32) {
    %c0_i32 = arith.constant 0 : i32
    %c0_i32_0 = arith.constant 0 : i32
    %c0_i32_1 = arith.constant 0 : i32
    return %c0_i32, %c0_i32_0 : i32, i32
  }
  func.func @transform_3(%arg0: i32) -> (i32, i32) {
    %c0_i32 = arith.constant 0 : i32
    %c0_i32_0 = arith.constant 0 : i32
    %c0_i32_1 = arith.constant 0 : i32
    return %c0_i32, %c0_i32_0 : i32, i32
  }
  func.func @transform_4(%arg0: i32) -> (i32, i32) {
    %c0_i32 = arith.constant 0 : i32
    %c0_i32_0 = arith.constant 0 : i32
    %c0_i32_1 = arith.constant 0 : i32
    return %c0_i32, %c0_i32_0 : i32, i32
  }
  func.func @transform_5(%arg0: i32) -> (i32, i32) {
    %c0_i32 = arith.constant 0 : i32
    %c0_i32_0 = arith.constant 0 : i32
    %c0_i32_1 = arith.constant 0 : i32
    return %c0_i32, %c0_i32_0 : i32, i32
  }
  func.func @transform_6(%arg0: i32) -> (i32, i32) {
    %c0_i32 = arith.constant 0 : i32
    %c0_i32_0 = arith.constant 0 : i32
    %c0_i32_1 = arith.constant 0 : i32
    return %c0_i32, %c0_i32_0 : i32, i32
  }
  func.func @transform_7(%arg0: i32) -> (i32, i32) {
    %c0_i32 = arith.constant 0 : i32
    %c0_i32_0 = arith.constant 0 : i32
    %c0_i32_1 = arith.constant 0 : i32
    return %c0_i32, %c0_i32_0 : i32, i32
  }
  func.func @transform_8(%arg0: i32) -> (i32, i32) {
    %c0_i32 = arith.constant 0 : i32
    %c0_i32_0 = arith.constant 0 : i32
    %c0_i32_1 = arith.constant 0 : i32
    return %c0_i32, %c0_i32_0 : i32, i32
  }
  func.func @transform_9(%arg0: i32) -> (i32, i32) {
    %c0_i32 = arith.constant 0 : i32
    %c0_i32_0 = arith.constant 0 : i32
    %c0_i32_1 = arith.constant 0 : i32
    return %c0_i32, %c0_i32_0 : i32, i32
  }
  func.func @transform_10(%arg0: i32) -> (i32, i32) {
    %c0_i32 = arith.constant 0 : i32
    %c0_i32_0 = arith.constant 0 : i32
    %c0_i32_1 = arith.constant 0 : i32
    return %c0_i32, %c0_i32_0 : i32, i32
  }
  func.func @transform_11(%arg0: i32) -> (i32, i32) {
    %c0_i32 = arith.constant 0 : i32
    %c0_i32_0 = arith.constant 0 : i32
    %c0_i32_1 = arith.constant 0 : i32
    return %c0_i32, %c0_i32_0 : i32, i32
  }
  func.func @transform_12(%arg0: i32) -> (i32, i32) {
    %c0_i32 = arith.constant 0 : i32
    %c0_i32_0 = arith.constant 0 : i32
    %c0_i32_1 = arith.constant 0 : i32
    return %c0_i32, %c0_i32_0 : i32, i32
  }
  func.func @transform_13(%arg0: i32) -> (i32, i32) {
    %c0_i32 = arith.constant 0 : i32
    %c0_i32_0 = arith.constant 0 : i32
    %c0_i32_1 = arith.constant 0 : i32
    return %c0_i32, %c0_i32_0 : i32, i32
  }
  func.func @transform_14(%arg0: i32) -> (i32, i32) {
    %c0_i32 = arith.constant 0 : i32
    %c0_i32_0 = arith.constant 0 : i32
    %c0_i32_1 = arith.constant 0 : i32
    return %c0_i32, %c0_i32_0 : i32, i32
  }
  func.func @transform_15(%arg0: i32) -> (i32, i32) {
    %c0_i32 = arith.constant 0 : i32
    %c0_i32_0 = arith.constant 0 : i32
    %c0_i32_1 = arith.constant 0 : i32
    return %c0_i32, %c0_i32_0 : i32, i32
  }
  func.func @transform_16(%arg0: i32) -> (i32, i32) {
    %c0_i32 = arith.constant 0 : i32
    %c0_i32_0 = arith.constant 0 : i32
    %c0_i32_1 = arith.constant 0 : i32
    return %c0_i32, %c0_i32_0 : i32, i32
  }
  func.func @transform_17(%arg0: i32) -> (i32, i32) {
    %c0_i32 = arith.constant 0 : i32
    %c0_i32_0 = arith.constant 0 : i32
    %c0_i32_1 = arith.constant 0 : i32
    return %c0_i32, %c0_i32_0 : i32, i32
  }
  func.func @transform_18(%arg0: i32) -> (i32, i32) {
    %c0_i32 = arith.constant 0 : i32
    %c0_i32_0 = arith.constant 0 : i32
    %c0_i32_1 = arith.constant 0 : i32
    return %c0_i32, %c0_i32_0 : i32, i32
  }
  func.func @transform_19(%arg0: i32) -> (i32, i32) {
    %c0_i32 = arith.constant 0 : i32
    %c0_i32_0 = arith.constant 0 : i32
    %c0_i32_1 = arith.constant 0 : i32
    return %c0_i32, %c0_i32_0 : i32, i32
  }
  func.func @transform_20(%arg0: i32) -> (i32, i32) {
    %c0_i32 = arith.constant 0 : i32
    %c0_i32_0 = arith.constant 0 : i32
    %c0_i32_1 = arith.constant 0 : i32
    return %c0_i32, %c0_i32_0 : i32, i32
  }
  func.func @transform_21(%arg0: i32) -> (i32, i32) {
    %c0_i32 = arith.constant 0 : i32
    %c0_i32_0 = arith.constant 0 : i32
    %c0_i32_1 = arith.constant 0 : i32
    return %c0_i32, %c0_i32_0 : i32, i32
  }
  func.func @transform_22(%arg0: i32) -> (i32, i32) {
    %c0_i32 = arith.constant 0 : i32
    %c0_i32_0 = arith.constant 0 : i32
    %c0_i32_1 = arith.constant 0 : i32
    return %c0_i32, %c0_i32_0 : i32, i32
  }
  func.func @transform_23(%arg0: i32) -> (i32, i32) {
    %c0_i32 = arith.constant 0 : i32
    %c0_i32_0 = arith.constant 0 : i32
    %c0_i32_1 = arith.constant 0 : i32
    return %c0_i32, %c0_i32_0 : i32, i32
  }
  func.func @transform_24(%arg0: i32) -> (i32, i32) {
    %c0_i32 = arith.constant 0 : i32
    %c0_i32_0 = arith.constant 0 : i32
    %c0_i32_1 = arith.constant 0 : i32
    return %c0_i32, %c0_i32_0 : i32, i32
  }
  func.func @transform_25(%arg0: i32) -> (i32, i32) {
    %c0_i32 = arith.constant 0 : i32
    %c0_i32_0 = arith.constant 0 : i32
    %c0_i32_1 = arith.constant 0 : i32
    return %c0_i32, %c0_i32_0 : i32, i32
  }
  func.func @transform_26(%arg0: i32) -> (i32, i32) {
    %c0_i32 = arith.constant 0 : i32
    %c0_i32_0 = arith.constant 0 : i32
    %c0_i32_1 = arith.constant 0 : i32
    return %c0_i32, %c0_i32_0 : i32, i32
  }
  func.func @transform_27(%arg0: i32) -> (i32, i32) {
    %c0_i32 = arith.constant 0 : i32
    %c0_i32_0 = arith.constant 0 : i32
    %c0_i32_1 = arith.constant 0 : i32
    return %c0_i32, %c0_i32_0 : i32, i32
  }
  func.func @transform_28(%arg0: i32) -> (i32, i32) {
    %c0_i32 = arith.constant 0 : i32
    %c0_i32_0 = arith.constant 0 : i32
    %c0_i32_1 = arith.constant 0 : i32
    return %c0_i32, %c0_i32_0 : i32, i32
  }
}

</mosaic_0001>

<llo_original>
// kernel: squeeze.4
$region0: #{squeeze.4}
  %s0 = inlined_call_operand.vmem [shape: f32[1,4,4], index: 0, kind: input, shape index: {}]
  %s1 = inlined_call_operand.vmem [shape: f32[1,16], index: 1, kind: output, shape index: {}]
  $region1: #{squeeze.4} parent=0
    #allocation0 [shape = 'u8[4096]{0}', space=vmem, size = 0x1000, scoped, tag = 'scoped mem for output reshape']
    #allocation1 [shape = 'u8[4096]{0}', space=vmem, size = 0x1000, scoped, tag = 'scoped mem for input reshape']
    %s3 = sshllo.u32 0, 4
    %v4 = vld [vmem:[%s0] sm:%s3]
    %5 = vst [vmem:[#allocation1] sm:%s3] %v4
    %v6 = vld [vmem:[#allocation1] sm:$0x1]
    %vm7 = vcmask 31744
    %8 = vst.msk [vmem:[#allocation0] sm:$0x1] %vm7, %v6
    %s9 = scalar_lea.vmem [#allocation1], 3
    %v10 = vld [vmem:[%s9] sm:$0x1]
    %11 = vrot.lane.b32.xlu0 %v10, 12
    %v12 = vpop.permute.xlu0 %11
    %vm13 = vcmask 130144
    %14 = vst.msk [vmem:[#allocation0] sm:$0x1] %vm13, %v12
    %s15 = scalar_lea.vmem [#allocation1], 2
    %v16 = vld [vmem:[%s15] sm:$0x1]
    %17 = vrot.lane.b32.xlu0 %v16, 8
    %v18 = vpop.permute.xlu0 %17
    %vm19 = vcmask 97344
    %20 = vst.msk [vmem:[#allocation0] sm:$0x1] %vm19, %v18
    %s21 = scalar_lea.vmem [#allocation1], 1
    %v22 = vld [vmem:[%s21] sm:$0x1]
    %23 = vrot.lane.b32.xlu0 %v22, 4
    %v24 = vpop.permute.xlu0 %23
    %vm25 = vcmask 64544
    %26 = vst.msk [vmem:[#allocation0] sm:$0x1] %vm25, %v24
    %s28 = sshllo.u32 0, 1
    %v30 = vld [vmem:[#allocation0] sm:%s28]
    %s31 = sshllo.u32 0, 1
    %32 = vst [vmem:[%s1] sm:%s31] %v30

// kernel: decoder_layer.1
$region0: #{decoder_layer.1}
  #allocation0 [shape = 'u32[]', space=smem, size = 0x4, offset = 0x4, fixed_abs, tag = 'smem constant byte address 0x4 - core index']
  #allocation1 [shape = 'u32[144,128]{1,0:T(1,128)}', space=vmem, size = 0x12000, scoped, tag = 'internal scratch']
  %s0 = inlined_call_operand.vmem [shape: f32[16,32], index: 0, kind: input, shape index: {}]
  %s1 = inlined_call_operand.vmem [shape: f32[8,32], index: 1, kind: input, shape index: {}]
  %s2 = inlined_call_operand.vmem [shape: f32[1,16], index: 2, kind: input, shape index: {}]
  %s3 = inlined_call_operand.vmem [shape: f32[1,16], index: 3, kind: input, shape index: {}]
  %s4 = inlined_call_operand.vmem [shape: f32[32,384], index: 4, kind: input, shape index: {}]
  %s5 = inlined_call_operand.vmem [shape: f32[1,384], index: 5, kind: input, shape index: {}]
  %s6 = inlined_call_operand.vmem [shape: f32[128,32], index: 6, kind: input, shape index: {}]
  %s7 = inlined_call_operand.vmem [shape: f32[1,32], index: 7, kind: input, shape index: {}]
  %s8 = inlined_call_operand.vmem [shape: f32[32,128], index: 8, kind: input, shape index: {}]
  %s9 = inlined_call_operand.vmem [shape: f32[1,128], index: 9, kind: input, shape index: {}]
  %s10 = inlined_call_operand.vmem [shape: f32[32,256], index: 10, kind: input, shape index: {}]
  %s11 = inlined_call_operand.vmem [shape: f32[1,256], index: 11, kind: input, shape index: {}]
  %s12 = inlined_call_operand.vmem [shape: f32[128,32], index: 12, kind: input, shape index: {}]
  %s13 = inlined_call_operand.vmem [shape: f32[1,32], index: 13, kind: input, shape index: {}]
  %s14 = inlined_call_operand.vmem [shape: f32[128,16], index: 14, kind: input, shape index: {}]
  %s15 = inlined_call_operand.vmem [shape: f32[16,128], index: 15, kind: input, shape index: {}]
  %s16 = inlined_call_operand.vmem [shape: f32[128,32], index: 16, kind: input, shape index: {}]
  %s17 = inlined_call_operand.vmem [shape: f32[8,128], index: 17, kind: input, shape index: {}]
  %s18 = inlined_call_operand.vmem [shape: f32[32,64], index: 18, kind: input, shape index: {}]
  %s19 = inlined_call_operand.vmem [shape: f32[1,64], index: 19, kind: input, shape index: {}]
  %s20 = inlined_call_operand.vmem [shape: f32[64,32], index: 20, kind: input, shape index: {}]
  %s21 = inlined_call_operand.vmem [shape: f32[1,32], index: 21, kind: input, shape index: {}]
  %s22 = inlined_call_operand.vmem [shape: f32[1,32], index: 22, kind: input, shape index: {}]
  %s23 = inlined_call_operand.vmem [shape: f32[1,32], index: 23, kind: input, shape index: {}]
  %s24 = inlined_call_operand.vmem [shape: f32[1,32], index: 24, kind: input, shape index: {}]
  %s25 = inlined_call_operand.vmem [shape: f32[1,32], index: 25, kind: input, shape index: {}]
  %s26 = inlined_call_operand.vmem [shape: f32[1,32], index: 26, kind: input, shape index: {}]
  %s27 = inlined_call_operand.vmem [shape: f32[1,32], index: 27, kind: input, shape index: {}]
  %s28 = inlined_call_operand.hbm [shape: f32[16,32], index: 28, kind: output, shape index: {}]
  %s29 = sld [smem:[#allocation0]]
  $region122: #{decoder_layer.1} parent=0
    _
  %s31 = ssub.s32 1, %s29
  %s32 = scalar_select 0, %s31, %s29
  $region1: #{decoder_layer.1} parent=0
    #allocation2 [shape = 'u8[8192]{0}', space=vmem, size = 0x2000, scoped, tag = 'output window, operand 0, single buffered']
    #allocation3 [shape = 's32[1]{0}', space=sflag, size = 0x4, scoped, tag = 'scoped memory for decoder_layer.1']
    %33 = vsyncpa [#allocation3], 0
    // Predicated region
    $region2: #{decoder_layer.1} parent=1 // pred_check
      _
    $region3: #{decoder_layer.1} parent=1 // pred_check_branch
      %35 = sbr.rel (0) target = $region5
    $region4: #{decoder_layer.1} parent=1 // pred_region
      _
    $region5: #{decoder_layer.1} parent=1 // pred_fallthru
      _
    // Predicated region
    $region6: #{decoder_layer.1} parent=1 // pred_check
      _
    $region7: #{decoder_layer.1} parent=1 // pred_check_branch
      %37 = sbr.rel (0) target = $region9
    $region8: #{decoder_layer.1} parent=1 // pred_region
      _
    $region9: #{decoder_layer.1} parent=1 // pred_fallthru
      _
    // Predicated region
    $region10: #{decoder_layer.1} parent=1 // pred_check
      _
    $region11: #{decoder_layer.1} parent=1 // pred_check_branch
      %39 = sbr.rel (0) target = $region13
    $region12: #{decoder_layer.1} parent=1 // pred_region
      _
    $region13: #{decoder_layer.1} parent=1 // pred_fallthru
      _
    // Predicated region
    $region14: #{decoder_layer.1} parent=1 // pred_check
      _
    $region15: #{decoder_layer.1} parent=1 // pred_check_branch
      %41 = sbr.rel (0) target = $region17
    $region16: #{decoder_layer.1} parent=1 // pred_region
      _
    $region17: #{decoder_layer.1} parent=1 // pred_fallthru
      _
    // Predicated region
    $region18: #{decoder_layer.1} parent=1 // pred_check
      _
    $region19: #{decoder_layer.1} parent=1 // pred_check_branch
      %43 = sbr.rel (0) target = $region21
    $region20: #{decoder_layer.1} parent=1 // pred_region
      _
    $region21: #{decoder_layer.1} parent=1 // pred_fallthru
      _
    // Predicated region
    $region22: #{decoder_layer.1} parent=1 // pred_check
      _
    $region23: #{decoder_layer.1} parent=1 // pred_check_branch
      %45 = sbr.rel (0) target = $region25
    $region24: #{decoder_layer.1} parent=1 // pred_region
      _
    $region25: #{decoder_layer.1} parent=1 // pred_fallthru
      _
    // Predicated region
    $region26: #{decoder_layer.1} parent=1 // pred_check
      _
    $region27: #{decoder_layer.1} parent=1 // pred_check_branch
      %47 = sbr.rel (0) target = $region29
    $region28: #{decoder_layer.1} parent=1 // pred_region
      _
    $region29: #{decoder_layer.1} parent=1 // pred_fallthru
      _
    // Predicated region
    $region30: #{decoder_layer.1} parent=1 // pred_check
      _
    $region31: #{decoder_layer.1} parent=1 // pred_check_branch
      %49 = sbr.rel (0) target = $region33
    $region32: #{decoder_layer.1} parent=1 // pred_region
      _
    $region33: #{decoder_layer.1} parent=1 // pred_fallthru
      _
    // Predicated region
    $region34: #{decoder_layer.1} parent=1 // pred_check
      _
    $region35: #{decoder_layer.1} parent=1 // pred_check_branch
      %51 = sbr.rel (0) target = $region37
    $region36: #{decoder_layer.1} parent=1 // pred_region
      _
    $region37: #{decoder_layer.1} parent=1 // pred_fallthru
      _
    // Predicated region
    $region38: #{decoder_layer.1} parent=1 // pred_check
      _
    $region39: #{decoder_layer.1} parent=1 // pred_check_branch
      %53 = sbr.rel (0) target = $region41
    $region40: #{decoder_layer.1} parent=1 // pred_region
      _
    $region41: #{decoder_layer.1} parent=1 // pred_fallthru
      _
    // Predicated region
    $region42: #{decoder_layer.1} parent=1 // pred_check
      _
    $region43: #{decoder_layer.1} parent=1 // pred_check_branch
      %55 = sbr.rel (0) target = $region45
    $region44: #{decoder_layer.1} parent=1 // pred_region
      _
    $region45: #{decoder_layer.1} parent=1 // pred_fallthru
      _
    // Predicated region
    $region46: #{decoder_layer.1} parent=1 // pred_check
      _
    $region47: #{decoder_layer.1} parent=1 // pred_check_branch
      %57 = sbr.rel (0) target = $region49
    $region48: #{decoder_layer.1} parent=1 // pred_region
      _
    $region49: #{decoder_layer.1} parent=1 // pred_fallthru
      _
    // Predicated region
    $region50: #{decoder_layer.1} parent=1 // pred_check
      _
    $region51: #{decoder_layer.1} parent=1 // pred_check_branch
      %59 = sbr.rel (0) target = $region53
    $region52: #{decoder_layer.1} parent=1 // pred_region
      _
    $region53: #{decoder_layer.1} parent=1 // pred_fallthru
      _
    // Predicated region
    $region54: #{decoder_layer.1} parent=1 // pred_check
      _
    $region55: #{decoder_layer.1} parent=1 // pred_check_branch
      %61 = sbr.rel (0) target = $region57
    $region56: #{decoder_layer.1} parent=1 // pred_region
      _
    $region57: #{decoder_layer.1} parent=1 // pred_fallthru
      _
    // Predicated region
    $region58: #{decoder_layer.1} parent=1 // pred_check
      _
    $region59: #{decoder_layer.1} parent=1 // pred_check_branch
      %63 = sbr.rel (0) target = $region61
    $region60: #{decoder_layer.1} parent=1 // pred_region
      _
    $region61: #{decoder_layer.1} parent=1 // pred_fallthru
      _
    // Predicated region
    $region62: #{decoder_layer.1} parent=1 // pred_check
      _
    $region63: #{decoder_layer.1} parent=1 // pred_check_branch
      %65 = sbr.rel (0) target = $region65
    $region64: #{decoder_layer.1} parent=1 // pred_region
      _
    $region65: #{decoder_layer.1} parent=1 // pred_fallthru
      _
    // Predicated region
    $region66: #{decoder_layer.1} parent=1 // pred_check
      _
    $region67: #{decoder_layer.1} parent=1 // pred_check_branch
      %67 = sbr.rel (0) target = $region69
    $region68: #{decoder_layer.1} parent=1 // pred_region
      _
    $region69: #{decoder_layer.1} parent=1 // pred_fallthru
      _
    // Predicated region
    $region70: #{decoder_layer.1} parent=1 // pred_check
      _
    $region71: #{decoder_layer.1} parent=1 // pred_check_branch
      %69 = sbr.rel (0) target = $region73
    $region72: #{decoder_layer.1} parent=1 // pred_region
      _
    $region73: #{decoder_layer.1} parent=1 // pred_fallthru
      _
    // Predicated region
    $region74: #{decoder_layer.1} parent=1 // pred_check
      _
    $region75: #{decoder_layer.1} parent=1 // pred_check_branch
      %71 = sbr.rel (0) target = $region77
    $region76: #{decoder_layer.1} parent=1 // pred_region
      _
    $region77: #{decoder_layer.1} parent=1 // pred_fallthru
      _
    // Predicated region
    $region78: #{decoder_layer.1} parent=1 // pred_check
      _
    $region79: #{decoder_layer.1} parent=1 // pred_check_branch
      %73 = sbr.rel (0) target = $region81
    $region80: #{decoder_layer.1} parent=1 // pred_region
      _
    $region81: #{decoder_layer.1} parent=1 // pred_fallthru
      _
    // Predicated region
    $region82: #{decoder_layer.1} parent=1 // pred_check
      _
    $region83: #{decoder_layer.1} parent=1 // pred_check_branch
      %75 = sbr.rel (0) target = $region85
    $region84: #{decoder_layer.1} parent=1 // pred_region
      _
    $region85: #{decoder_layer.1} parent=1 // pred_fallthru
      _
    // Predicated region
    $region86: #{decoder_layer.1} parent=1 // pred_check
      _
    $region87: #{decoder_layer.1} parent=1 // pred_check_branch
      %77 = sbr.rel (0) target = $region89
    $region88: #{decoder_layer.1} parent=1 // pred_region
      _
    $region89: #{decoder_layer.1} parent=1 // pred_fallthru
      _
    // Predicated region
    $region90: #{decoder_layer.1} parent=1 // pred_check
      _
    $region91: #{decoder_layer.1} parent=1 // pred_check_branch
      %79 = sbr.rel (0) target = $region93
    $region92: #{decoder_layer.1} parent=1 // pred_region
      _
    $region93: #{decoder_layer.1} parent=1 // pred_fallthru
      _
    // Predicated region
    $region94: #{decoder_layer.1} parent=1 // pred_check
      _
    $region95: #{decoder_layer.1} parent=1 // pred_check_branch
      %81 = sbr.rel (0) target = $region97
    $region96: #{decoder_layer.1} parent=1 // pred_region
      _
    $region97: #{decoder_layer.1} parent=1 // pred_fallthru
      _
    // Predicated region
    $region98: #{decoder_layer.1} parent=1 // pred_check
      _
    $region99: #{decoder_layer.1} parent=1 // pred_check_branch
      %83 = sbr.rel (0) target = $region101
    $region100: #{decoder_layer.1} parent=1 // pred_region
      _
    $region101: #{decoder_layer.1} parent=1 // pred_fallthru
      _
    // Predicated region
    $region102: #{decoder_layer.1} parent=1 // pred_check
      _
    $region103: #{decoder_layer.1} parent=1 // pred_check_branch
      %85 = sbr.rel (0) target = $region105
    $region104: #{decoder_layer.1} parent=1 // pred_region
      _
    $region105: #{decoder_layer.1} parent=1 // pred_fallthru
      _
    // Predicated region
    $region106: #{decoder_layer.1} parent=1 // pred_check
      _
    $region107: #{decoder_layer.1} parent=1 // pred_check_branch
      %87 = sbr.rel (0) target = $region109
    $region108: #{decoder_layer.1} parent=1 // pred_region
      _
    $region109: #{decoder_layer.1} parent=1 // pred_fallthru
      _
    // Predicated region
    $region110: #{decoder_layer.1} parent=1 // pred_check
      _
    $region111: #{decoder_layer.1} parent=1 // pred_check_branch
      %89 = sbr.rel (0) target = $region113
    $region112: #{decoder_layer.1} parent=1 // pred_region
      _
    $region113: #{decoder_layer.1} parent=1 // pred_fallthru
      _
    %v90 = vld [vmem:[%s0] sm:$0xff]
    %v91 = vld [vmem:[%s0 + $0x8] sm:$0xff]
    %v92 = vld [vmem:[%s1] sm:$0xff]
    %v93 = vld [vmem:[%s14] sm:$0xff]
    %v94 = vld [vmem:[%s14 + $0x8] sm:$0xff]
    %v95 = vld [vmem:[%s14 + $0x10] sm:$0xff]
    %v96 = vld [vmem:[%s14 + $0x18] sm:$0xff]
    %v97 = vld [vmem:[%s14 + $0x20] sm:$0xff]
    %v98 = vld [vmem:[%s14 + $0x28] sm:$0xff]
    %v99 = vld [vmem:[%s14 + $0x30] sm:$0xff]
    %v100 = vld [vmem:[%s14 + $0x38] sm:$0xff]
    %v101 = vld [vmem:[%s14 + $0x40] sm:$0xff]
    %v102 = vld [vmem:[%s14 + $0x48] sm:$0xff]
    %v103 = vld [vmem:[%s14 + $0x50] sm:$0xff]
    %v104 = vld [vmem:[%s14 + $0x58] sm:$0xff]
    %v105 = vld [vmem:[%s14 + $0x60] sm:$0xff]
    %v106 = vld [vmem:[%s14 + $0x68] sm:$0xff]
    %v107 = vld [vmem:[%s14 + $0x70] sm:$0xff]
    %v108 = vld [vmem:[%s14 + $0x78] sm:$0xff]
    %v109 = vld [vmem:[%s15] sm:$0xff]
    %v110 = vld [vmem:[%s15 + $0x8] sm:$0xff]
    %v111 = vld [vmem:[%s16] sm:$0xff]
    %v112 = vld [vmem:[%s16 + $0x8] sm:$0xff]
    %v113 = vld [vmem:[%s16 + $0x10] sm:$0xff]
    %v114 = vld [vmem:[%s16 + $0x18] sm:$0xff]
    %v115 = vld [vmem:[%s16 + $0x20] sm:$0xff]
    %v116 = vld [vmem:[%s16 + $0x28] sm:$0xff]
    %v117 = vld [vmem:[%s16 + $0x30] sm:$0xff]
    %v118 = vld [vmem:[%s16 + $0x38] sm:$0xff]
    %v119 = vld [vmem:[%s16 + $0x40] sm:$0xff]
    %v120 = vld [vmem:[%s16 + $0x48] sm:$0xff]
    %v121 = vld [vmem:[%s16 + $0x50] sm:$0xff]
    %v122 = vld [vmem:[%s16 + $0x58] sm:$0xff]
    %v123 = vld [vmem:[%s16 + $0x60] sm:$0xff]
    %v124 = vld [vmem:[%s16 + $0x68] sm:$0xff]
    %v125 = vld [vmem:[%s16 + $0x70] sm:$0xff]
    %v126 = vld [vmem:[%s16 + $0x78] sm:$0xff]
    %v127 = vld [vmem:[%s17] sm:$0xff]
    %v128 = vld [vmem:[%s4] sm:$0xff]
    %v129 = vld [vmem:[%s4 + $0x8] sm:$0xff]
    %v130 = vld [vmem:[%s4 + $0x10] sm:$0xff]
    %v131 = vld [vmem:[%s4 + $0x18] sm:$0xff]
    %v132 = vld [vmem:[%s4 + $0x20] sm:$0xff]
    %v133 = vld [vmem:[%s4 + $0x28] sm:$0xff]
    %v134 = vld [vmem:[%s4 + $0x30] sm:$0xff]
    %v135 = vld [vmem:[%s4 + $0x38] sm:$0xff]
    %v136 = vld [vmem:[%s4 + $0x40] sm:$0xff]
    %v137 = vld [vmem:[%s4 + $0x48] sm:$0xff]
    %v138 = vld [vmem:[%s4 + $0x50] sm:$0xff]
    %v139 = vld [vmem:[%s4 + $0x58] sm:$0xff]
    %v140 = vld [vmem:[%s5] sm:$0x7]
    %v142 = vlaneseq
    %v143 = vshrl.u32 %v142, 7
    %v144 = vsub.s32 0, %v143
    %v145 = vrot.slane %v140, %v144
    %v146 = vlaneseq
    %v147 = vshrl.u32 %v146, 7
    %v148 = vsub.s32 1, %v147
    %v149 = vrot.slane %v140, %v148
    %v150 = vlaneseq
    %v151 = vshrl.u32 %v150, 7
    %v152 = vsub.s32 2, %v151
    %v153 = vrot.slane %v140, %v152
    %vm157 = vcmask 261120
    %v159 = vsel %vm157, %v90, 0
    %161 = vmatprep.subr.mxu0 %v129
    %162 = vmatpush1.msra.mxu0 %v128
    %163 = vmatprep.subr.mxu0 %v132
    %164 = vmatpush1.msra.mxu0 %v131
    %165 = vmatprep.subr.mxu0 %v135
    %166 = vmatpush1.msra.mxu0 %v134
    %167 = vmatprep.subr.mxu0 %v138
    %168 = vmatpush1.msra.mxu0 %v137
    %169 = vmatprep.subr.mxu0 0.0
    %170 = vmatpush1.msra.mxu0 0.0
    %171 = vmatprep.subr.mxu0 0.0
    %172 = vmatpush1.msra.mxu0 0.0
    %173 = vmatprep.subr.mxu0 0.0
    %174 = vmatpush1.msra.mxu0 0.0
    %175 = vmatprep.subr.mxu0 0.0
    %176 = vmatpush1.msra.mxu0 0.0
    %177 = vmatprep.subr.mxu0 0.0
    %178 = vmatpush1.msra.mxu0 0.0
    %179 = vmatprep.subr.mxu0 0.0
    %180 = vmatpush1.msra.mxu0 0.0
    %181 = vmatprep.subr.mxu0 0.0
    %182 = vmatpush1.msra.mxu0 0.0
    %183 = vmatprep.subr.mxu0 0.0
    %184 = vmatpush1.msra.mxu0 0.0
    %185 = vmatprep.subr.mxu0 0.0
    %186 = vmatpush1.msra.mxu0 0.0
    %187 = vmatprep.subr.mxu0 0.0
    %188 = vmatpush1.msra.mxu0 0.0
    %189 = vmatprep.subr.mxu0 0.0
    %190 = vmatpush1.msra.mxu0 0.0
    %191 = vmatprep.subr.mxu0 0.0
    %192 = vmatpush1.msra.mxu0 0.0
    %193 = vmatprep.subr.mxu0 0.0
    %194 = vmatpush1.msra.mxu0 0.0
    %195 = vmatprep.subr.mxu0 0.0
    %196 = vmatpush1.msra.mxu0 0.0
    %197 = vmatprep.subr.mxu0 0.0
    %198 = vmatpush1.msra.mxu0 0.0
    %199 = vmatprep.subr.mxu0 0.0
    %200 = vmatpush1.msra.mxu0 0.0
    %201 = vmatprep.subr.mxu0 0.0
    %202 = vmatpush1.msra.mxu0 0.0
    %203 = vmatprep.subr.mxu0 0.0
    %204 = vmatpush1.msra.mxu0 0.0
    %205 = vmatprep.subr.mxu0 0.0
    %206 = vmatpush1.msra.mxu0 0.0
    %207 = vmatprep.subr.mxu0 0.0
    %208 = vmatpush1.msra.mxu0 0.0
    %209 = vmatprep.subr.mxu0 0.0
    %210 = vmatpush1.msra.mxu0 0.0
    %211 = vmatprep.subr.mxu0 0.0
    %212 = vmatpush1.msra.mxu0 0.0
    %213 = vmatprep.subr.mxu0 0.0
    %214 = vmatpush1.msra.mxu0 0.0
    %215 = vmatprep.subr.mxu0 0.0
    %216 = vmatpush1.msra.mxu0 0.0
    %217 = vmatprep.subr.mxu0 0.0
    %218 = vmatpush1.msra.mxu0 0.0
    %219 = vmatprep.subr.mxu0 0.0
    %220 = vmatpush1.msra.mxu0 0.0
    %221 = vmatprep.subr.mxu0 0.0
    %222 = vmatpush1.msra.mxu0 0.0
    %223 = vmatprep.subr.mxu0 0.0
    %224 = vmatpush1.msra.mxu0 0.0
    %225 = vmatprep.mubr.f32.mxu0 0.0
    %226 = vmatmul.mubr.f32.gmra.mrb[0].mxu0 %v159
    %v227 = vpop.f32.mrb[0].mxu0
    %v228 = vadd.f32 %v145, %v227
    %v229 = vpop.f32.mrb[0].mxu0
    %v230 = vadd.f32 %v149, %v229
    %231 = vdwg.mxu0
    %232 = vmatprep.subr.mxu0 0.0
    %233 = vmatpush1.msra.mxu0 %v130
    %234 = vmatprep.subr.mxu0 0.0
    %235 = vmatpush1.msra.mxu0 %v133
    %236 = vmatprep.subr.mxu0 0.0
    %237 = vmatpush1.msra.mxu0 %v136
    %238 = vmatprep.subr.mxu0 0.0
    %239 = vmatpush1.msra.mxu0 %v139
    %240 = vmatprep.subr.mxu0 0.0
    %241 = vmatpush1.msra.mxu0 0.0
    %242 = vmatprep.subr.mxu0 0.0
    %243 = vmatpush1.msra.mxu0 0.0
    %244 = vmatprep.subr.mxu0 0.0
    %245 = vmatpush1.msra.mxu0 0.0
    %246 = vmatprep.subr.mxu0 0.0
    %247 = vmatpush1.msra.mxu0 0.0
    %248 = vmatprep.subr.mxu0 0.0
    %249 = vmatpush1.msra.mxu0 0.0
    %250 = vmatprep.subr.mxu0 0.0
    %251 = vmatpush1.msra.mxu0 0.0
    %252 = vmatprep.subr.mxu0 0.0
    %253 = vmatpush1.msra.mxu0 0.0
    %254 = vmatprep.subr.mxu0 0.0
    %255 = vmatpush1.msra.mxu0 0.0
    %256 = vmatprep.subr.mxu0 0.0
    %257 = vmatpush1.msra.mxu0 0.0
    %258 = vmatprep.subr.mxu0 0.0
    %259 = vmatpush1.msra.mxu0 0.0
    %260 = vmatprep.subr.mxu0 0.0
    %261 = vmatpush1.msra.mxu0 0.0
    %262 = vmatprep.subr.mxu0 0.0
    %263 = vmatpush1.msra.mxu0 0.0
    %264 = vmatprep.subr.mxu0 0.0
    %265 = vmatpush1.msra.mxu0 0.0
    %266 = vmatprep.subr.mxu0 0.0
    %267 = vmatpush1.msra.mxu0 0.0
    %268 = vmatprep.subr.mxu0 0.0
    %269 = vmatpush1.msra.mxu0 0.0
    %270 = vmatprep.subr.mxu0 0.0
    %271 = vmatpush1.msra.mxu0 0.0
    %272 = vmatprep.subr.mxu0 0.0
    %273 = vmatpush1.msra.mxu0 0.0
    %274 = vmatprep.subr.mxu0 0.0
    %275 = vmatpush1.msra.mxu0 0.0
    %276 = vmatprep.subr.mxu0 0.0
    %277 = vmatpush1.msra.mxu0 0.0
    %278 = vmatprep.subr.mxu0 0.0
    %279 = vmatpush1.msra.mxu0 0.0
    %280 = vmatprep.subr.mxu0 0.0
    %281 = vmatpush1.msra.mxu0 0.0
    %282 = vmatprep.subr.mxu0 0.0
    %283 = vmatpush1.msra.mxu0 0.0
    %284 = vmatprep.subr.mxu0 0.0
    %285 = vmatpush1.msra.mxu0 0.0
    %286 = vmatprep.subr.mxu0 0.0
    %287 = vmatpush1.msra.mxu0 0.0
    %288 = vmatprep.subr.mxu0 0.0
    %289 = vmatpush1.msra.mxu0 0.0
    %290 = vmatprep.subr.mxu0 0.0
    %291 = vmatpush1.msra.mxu0 0.0
    %292 = vmatprep.subr.mxu0 0.0
    %293 = vmatpush1.msra.mxu0 0.0
    %294 = vmatprep.subr.mxu0 0.0
    %295 = vmatpush1.msra.mxu0 0.0
    %296 = vmatprep.mubr.f32.mxu0 0.0
    %297 = vmatmul.mubr.f32.gmra.mrb[0].mxu0 %v159
    %v298 = vpop.f32.mrb[0].mxu0
    %v299 = vadd.f32 %v153, %v298
    %v300 = vpop.f32.mrb[0].mxu0
    %301 = vdwg.mxu0
    %v302 = vld [vmem:[%s2] sm:$0x1]
    %v303 = vld [vmem:[%s6] sm:$0xff]
    %v304 = vld [vmem:[%s6 + $0x8] sm:$0xff]
    %v305 = vld [vmem:[%s6 + $0x10] sm:$0xff]
    %v306 = vld [vmem:[%s6 + $0x18] sm:$0xff]
    %v307 = vld [vmem:[%s6 + $0x20] sm:$0xff]
    %v308 = vld [vmem:[%s6 + $0x28] sm:$0xff]
    %v309 = vld [vmem:[%s6 + $0x30] sm:$0xff]
    %v310 = vld [vmem:[%s6 + $0x38] sm:$0xff]
    %v311 = vld [vmem:[%s6 + $0x40] sm:$0xff]
    %v312 = vld [vmem:[%s6 + $0x48] sm:$0xff]
    %v313 = vld [vmem:[%s6 + $0x50] sm:$0xff]
    %v314 = vld [vmem:[%s6 + $0x58] sm:$0xff]
    %v315 = vld [vmem:[%s6 + $0x60] sm:$0xff]
    %v316 = vld [vmem:[%s6 + $0x68] sm:$0xff]
    %v317 = vld [vmem:[%s6 + $0x70] sm:$0xff]
    %v318 = vld [vmem:[%s6 + $0x78] sm:$0xff]
    %v319 = vld [vmem:[%s7] sm:$0x1]
    %v320 = vmul.f32 %v228, %v230
    %321 = vmatprep.subr.mxu0 0.0
    %322 = vmatpush1.msra.mxu0 %v93
    %323 = vmatprep.subr.mxu0 0.0
    %324 = vmatpush1.msra.mxu0 %v94
    %325 = vmatprep.subr.mxu0 0.0
    %326 = vmatpush1.msra.mxu0 %v95
    %327 = vmatprep.subr.mxu0 0.0
    %328 = vmatpush1.msra.mxu0 %v96
    %329 = vmatprep.subr.mxu0 0.0
    %330 = vmatpush1.msra.mxu0 %v97
    %331 = vmatprep.subr.mxu0 0.0
    %332 = vmatpush1.msra.mxu0 %v98
    %333 = vmatprep.subr.mxu0 0.0
    %334 = vmatpush1.msra.mxu0 %v99
    %335 = vmatprep.subr.mxu0 0.0
    %336 = vmatpush1.msra.mxu0 %v100
    %337 = vmatprep.subr.mxu0 0.0
    %338 = vmatpush1.msra.mxu0 %v101
    %339 = vmatprep.subr.mxu0 0.0
    %340 = vmatpush1.msra.mxu0 %v102
    %341 = vmatprep.subr.mxu0 0.0
    %342 = vmatpush1.msra.mxu0 %v103
    %343 = vmatprep.subr.mxu0 0.0
    %344 = vmatpush1.msra.mxu0 %v104
    %345 = vmatprep.subr.mxu0 0.0
    %346 = vmatpush1.msra.mxu0 %v105
    %347 = vmatprep.subr.mxu0 0.0
    %348 = vmatpush1.msra.mxu0 %v106
    %349 = vmatprep.subr.mxu0 0.0
    %350 = vmatpush1.msra.mxu0 %v107
    %351 = vmatprep.subr.mxu0 0.0
    %352 = vmatpush1.msra.mxu0 %v108
    %353 = vmatprep.subr.mxu0 0.0
    %354 = vmatpush1.msra.mxu0 0.0
    %355 = vmatprep.subr.mxu0 0.0
    %356 = vmatpush1.msra.mxu0 0.0
    %357 = vmatprep.subr.mxu0 0.0
    %358 = vmatpush1.msra.mxu0 0.0
    %359 = vmatprep.subr.mxu0 0.0
    %360 = vmatpush1.msra.mxu0 0.0
    %361 = vmatprep.subr.mxu0 0.0
    %362 = vmatpush1.msra.mxu0 0.0
    %363 = vmatprep.subr.mxu0 0.0
    %364 = vmatpush1.msra.mxu0 0.0
    %365 = vmatprep.subr.mxu0 0.0
    %366 = vmatpush1.msra.mxu0 0.0
    %367 = vmatprep.subr.mxu0 0.0
    %368 = vmatpush1.msra.mxu0 0.0
    %369 = vmatprep.subr.mxu0 0.0
    %370 = vmatpush1.msra.mxu0 0.0
    %371 = vmatprep.subr.mxu0 0.0
    %372 = vmatpush1.msra.mxu0 0.0
    %373 = vmatprep.subr.mxu0 0.0
    %374 = vmatpush1.msra.mxu0 0.0
    %375 = vmatprep.subr.mxu0 0.0
    %376 = vmatpush1.msra.mxu0 0.0
    %377 = vmatprep.subr.mxu0 0.0
    %378 = vmatpush1.msra.mxu0 0.0
    %379 = vmatprep.subr.mxu0 0.0
    %380 = vmatpush1.msra.mxu0 0.0
    %381 = vmatprep.subr.mxu0 0.0
    %382 = vmatpush1.msra.mxu0 0.0
    %383 = vmatprep.subr.mxu0 0.0
    %384 = vmatpush1.msra.mxu0 0.0
    %385 = vmatprep.mubr.f32.mxu0 0.0
    %386 = vmatmul.mubr.f32.gmra.mrb[0].mxu0 %v320
    %v387 = vpop.f32.mrb[0].mxu0
    %v388 = vadd.f32 0.0, %v387
    %v389 = vpop.f32.mrb[0].mxu0
    %390 = vdwg.mxu0
    %v392 = vlaneseq
    %v393 = vshrl.u32 %v392, 7
    %v394 = vsub.s32 0, %v393
    %v395 = vrot.slane %v302, %v394
    %vm397 = vcmp.eq.f32.partialorder %v395, 0.0
    %v398 = vsel %vm397, -1e+09, %v388
    %vm399 = vcmask 130048
    %v401 = vsel %vm399, %v398, 0
    %403 = vmatprep.subr.mxu0 0.0
    %404 = vmatpush1.msra.mxu0 %v109
    %405 = vmatprep.subr.mxu0 0.0
    %406 = vmatpush1.msra.mxu0 %v110
    %407 = vmatprep.subr.mxu0 0.0
    %408 = vmatpush1.msra.mxu0 0.0
    %409 = vmatprep.subr.mxu0 0.0
    %410 = vmatpush1.msra.mxu0 0.0
    %411 = vmatprep.subr.mxu0 0.0
    %412 = vmatpush1.msra.mxu0 0.0
    %413 = vmatprep.subr.mxu0 0.0
    %414 = vmatpush1.msra.mxu0 0.0
    %415 = vmatprep.subr.mxu0 0.0
    %416 = vmatpush1.msra.mxu0 0.0
    %417 = vmatprep.subr.mxu0 0.0
    %418 = vmatpush1.msra.mxu0 0.0
    %419 = vmatprep.subr.mxu0 0.0
    %420 = vmatpush1.msra.mxu0 0.0
    %421 = vmatprep.subr.mxu0 0.0
    %422 = vmatpush1.msra.mxu0 0.0
    %423 = vmatprep.subr.mxu0 0.0
    %424 = vmatpush1.msra.mxu0 0.0
    %425 = vmatprep.subr.mxu0 0.0
    %426 = vmatpush1.msra.mxu0 0.0
    %427 = vmatprep.subr.mxu0 0.0
    %428 = vmatpush1.msra.mxu0 0.0
    %429 = vmatprep.subr.mxu0 0.0
    %430 = vmatpush1.msra.mxu0 0.0
    %431 = vmatprep.subr.mxu0 0.0
    %432 = vmatpush1.msra.mxu0 0.0
    %433 = vmatprep.subr.mxu0 0.0
    %434 = vmatpush1.msra.mxu0 0.0
    %435 = vmatprep.subr.mxu0 0.0
    %436 = vmatpush1.msra.mxu0 0.0
    %437 = vmatprep.subr.mxu0 0.0
    %438 = vmatpush1.msra.mxu0 0.0
    %439 = vmatprep.subr.mxu0 0.0
    %440 = vmatpush1.msra.mxu0 0.0
    %441 = vmatprep.subr.mxu0 0.0
    %442 = vmatpush1.msra.mxu0 0.0
    %443 = vmatprep.subr.mxu0 0.0
    %444 = vmatpush1.msra.mxu0 0.0
    %445 = vmatprep.subr.mxu0 0.0
    %446 = vmatpush1.msra.mxu0 0.0
    %447 = vmatprep.subr.mxu0 0.0
    %448 = vmatpush1.msra.mxu0 0.0
    %449 = vmatprep.subr.mxu0 0.0
    %450 = vmatpush1.msra.mxu0 0.0
    %451 = vmatprep.subr.mxu0 0.0
    %452 = vmatpush1.msra.mxu0 0.0
    %453 = vmatprep.subr.mxu0 0.0
    %454 = vmatpush1.msra.mxu0 0.0
    %455 = vmatprep.subr.mxu0 0.0
    %456 = vmatpush1.msra.mxu0 0.0
    %457 = vmatprep.subr.mxu0 0.0
    %458 = vmatpush1.msra.mxu0 0.0
    %459 = vmatprep.subr.mxu0 0.0
    %460 = vmatpush1.msra.mxu0 0.0
    %461 = vmatprep.subr.mxu0 0.0
    %462 = vmatpush1.msra.mxu0 0.0
    %463 = vmatprep.subr.mxu0 0.0
    %464 = vmatpush1.msra.mxu0 0.0
    %465 = vmatprep.subr.mxu0 0.0
    %466 = vmatpush1.msra.mxu0 0.0
    %467 = vmatprep.mubr.f32.mxu0 0.0
    %468 = vmatmul.mubr.f32.gmra.mrb[0].mxu0 %v401
    %v469 = vpop.f32.mrb[0].mxu0
    %v470 = vadd.f32 0.0, %v469
    %v471 = vpop.f32.mrb[0].mxu0
    %472 = vdwg.mxu0
    %v473 = vmul.f32 %v470, %v299
    %474 = vmatprep.subr.mxu0 0.0
    %475 = vmatpush1.msra.mxu0 %v111
    %476 = vmatprep.subr.mxu0 0.0
    %477 = vmatpush1.msra.mxu0 %v112
    %478 = vmatprep.subr.mxu0 0.0
    %479 = vmatpush1.msra.mxu0 %v113
    %480 = vmatprep.subr.mxu0 0.0
    %481 = vmatpush1.msra.mxu0 %v114
    %482 = vmatprep.subr.mxu0 0.0
    %483 = vmatpush1.msra.mxu0 %v115
    %484 = vmatprep.subr.mxu0 0.0
    %485 = vmatpush1.msra.mxu0 %v116
    %486 = vmatprep.subr.mxu0 0.0
    %487 = vmatpush1.msra.mxu0 %v117
    %488 = vmatprep.subr.mxu0 0.0
    %489 = vmatpush1.msra.mxu0 %v118
    %490 = vmatprep.subr.mxu0 0.0
    %491 = vmatpush1.msra.mxu0 %v119
    %492 = vmatprep.subr.mxu0 0.0
    %493 = vmatpush1.msra.mxu0 %v120
    %494 = vmatprep.subr.mxu0 0.0
    %495 = vmatpush1.msra.mxu0 %v121
    %496 = vmatprep.subr.mxu0 0.0
    %497 = vmatpush1.msra.mxu0 %v122
    %498 = vmatprep.subr.mxu0 0.0
    %499 = vmatpush1.msra.mxu0 %v123
    %500 = vmatprep.subr.mxu0 0.0
    %501 = vmatpush1.msra.mxu0 %v124
    %502 = vmatprep.subr.mxu0 0.0
    %503 = vmatpush1.msra.mxu0 %v125
    %504 = vmatprep.subr.mxu0 0.0
    %505 = vmatpush1.msra.mxu0 %v126
    %506 = vmatprep.subr.mxu0 0.0
    %507 = vmatpush1.msra.mxu0 0.0
    %508 = vmatprep.subr.mxu0 0.0
    %509 = vmatpush1.msra.mxu0 0.0
    %510 = vmatprep.subr.mxu0 0.0
    %511 = vmatpush1.msra.mxu0 0.0
    %512 = vmatprep.subr.mxu0 0.0
    %513 = vmatpush1.msra.mxu0 0.0
    %514 = vmatprep.subr.mxu0 0.0
    %515 = vmatpush1.msra.mxu0 0.0
    %516 = vmatprep.subr.mxu0 0.0
    %517 = vmatpush1.msra.mxu0 0.0
    %518 = vmatprep.subr.mxu0 0.0
    %519 = vmatpush1.msra.mxu0 0.0
    %520 = vmatprep.subr.mxu0 0.0
    %521 = vmatpush1.msra.mxu0 0.0
    %522 = vmatprep.subr.mxu0 0.0
    %523 = vmatpush1.msra.mxu0 0.0
    %524 = vmatprep.subr.mxu0 0.0
    %525 = vmatpush1.msra.mxu0 0.0
    %526 = vmatprep.subr.mxu0 0.0
    %527 = vmatpush1.msra.mxu0 0.0
    %528 = vmatprep.subr.mxu0 0.0
    %529 = vmatpush1.msra.mxu0 0.0
    %530 = vmatprep.subr.mxu0 0.0
    %531 = vmatpush1.msra.mxu0 0.0
    %532 = vmatprep.subr.mxu0 0.0
    %533 = vmatpush1.msra.mxu0 0.0
    %534 = vmatprep.subr.mxu0 0.0
    %535 = vmatpush1.msra.mxu0 0.0
    %536 = vmatprep.subr.mxu0 0.0
    %537 = vmatpush1.msra.mxu0 0.0
    %538 = vmatprep.mubr.f32.mxu0 0.0
    %539 = vmatmul.mubr.f32.gmra.mrb[0].mxu0 %v473
    %v540 = vpop.f32.mrb[0].mxu0
    %v541 = vadd.f32 0.0, %v540
    %v542 = vpop.f32.mrb[0].mxu0
    %543 = vdwg.mxu0
    %v545 = vrot.slane %v541, 1
    %546 = vrot.lane.b32.xlu0 %v545, 32
    %v547 = vpop.permute.xlu0 %546
    %v549 = vrot.slane %v541, 2
    %550 = vrot.lane.b32.xlu0 %v549, 64
    %v551 = vpop.permute.xlu0 %550
    %v553 = vrot.slane %v541, 3
    %554 = vrot.lane.b32.xlu0 %v553, 96
    %v555 = vpop.permute.xlu0 %554
    %v557 = vsel %vm157, %v541, %v547
    %vm558 = vcmask 523264
    %v559 = vsel %vm558, %v557, %v551
    %vm560 = vcmask 785408
    %v561 = vsel %vm560, %v559, %v555
    %v563 = vrot.slane %v561, 3
    %vm565 = vcmask 1040384
    %v566 = vsel %vm565, %v561, %v563
    %v568 = vrot.slane %v566, 6
    %v570 = vrot.slane %v566, 4
    %v572 = vrot.slane %v566, 2
    %vm574 = vcmask 1041408
    %v575 = vsel %vm574, %v566, %v568
    %vm576 = vcmask 1043456
    %v577 = vsel %vm576, %v575, %v570
    %vm578 = vcmask 1045504
    %v579 = vsel %vm578, %v577, %v572
    %v580 = vmul.f32 %v579, %v127
    %v582 = vlaneseq
    %v583 = vshrl.u32 %v582, 7
    %v584 = vsub.s32 0, %v583
    %v585 = vrot.slane %v319, %v584
    %587 = vmatprep.subr.mxu0 0.0
    %588 = vmatpush1.msra.mxu0 %v303
    %589 = vmatprep.subr.mxu0 0.0
    %590 = vmatpush1.msra.mxu0 %v304
    %591 = vmatprep.subr.mxu0 0.0
    %592 = vmatpush1.msra.mxu0 %v305
    %593 = vmatprep.subr.mxu0 0.0
    %594 = vmatpush1.msra.mxu0 %v306
    %595 = vmatprep.subr.mxu0 0.0
    %596 = vmatpush1.msra.mxu0 %v307
    %597 = vmatprep.subr.mxu0 0.0
    %598 = vmatpush1.msra.mxu0 %v308
    %599 = vmatprep.subr.mxu0 0.0
    %600 = vmatpush1.msra.mxu0 %v309
    %601 = vmatprep.subr.mxu0 0.0
    %602 = vmatpush1.msra.mxu0 %v310
    %603 = vmatprep.subr.mxu0 0.0
    %604 = vmatpush1.msra.mxu0 %v311
    %605 = vmatprep.subr.mxu0 0.0
    %606 = vmatpush1.msra.mxu0 %v312
    %607 = vmatprep.subr.mxu0 0.0
    %608 = vmatpush1.msra.mxu0 %v313
    %609 = vmatprep.subr.mxu0 0.0
    %610 = vmatpush1.msra.mxu0 %v314
    %611 = vmatprep.subr.mxu0 0.0
    %612 = vmatpush1.msra.mxu0 %v315
    %613 = vmatprep.subr.mxu0 0.0
    %614 = vmatpush1.msra.mxu0 %v316
    %615 = vmatprep.subr.mxu0 0.0
    %616 = vmatpush1.msra.mxu0 %v317
    %617 = vmatprep.subr.mxu0 0.0
    %618 = vmatpush1.msra.mxu0 %v318
    %619 = vmatprep.subr.mxu0 0.0
    %620 = vmatpush1.msra.mxu0 0.0
    %621 = vmatprep.subr.mxu0 0.0
    %622 = vmatpush1.msra.mxu0 0.0
    %623 = vmatprep.subr.mxu0 0.0
    %624 = vmatpush1.msra.mxu0 0.0
    %625 = vmatprep.subr.mxu0 0.0
    %626 = vmatpush1.msra.mxu0 0.0
    %627 = vmatprep.subr.mxu0 0.0
    %628 = vmatpush1.msra.mxu0 0.0
    %629 = vmatprep.subr.mxu0 0.0
    %630 = vmatpush1.msra.mxu0 0.0
    %631 = vmatprep.subr.mxu0 0.0
    %632 = vmatpush1.msra.mxu0 0.0
    %633 = vmatprep.subr.mxu0 0.0
    %634 = vmatpush1.msra.mxu0 0.0
    %635 = vmatprep.subr.mxu0 0.0
    %636 = vmatpush1.msra.mxu0 0.0
    %637 = vmatprep.subr.mxu0 0.0
    %638 = vmatpush1.msra.mxu0 0.0
    %639 = vmatprep.subr.mxu0 0.0
    %640 = vmatpush1.msra.mxu0 0.0
    %641 = vmatprep.subr.mxu0 0.0
    %642 = vmatpush1.msra.mxu0 0.0
    %643 = vmatprep.subr.mxu0 0.0
    %644 = vmatpush1.msra.mxu0 0.0
    %645 = vmatprep.subr.mxu0 0.0
    %646 = vmatpush1.msra.mxu0 0.0
    %647 = vmatprep.subr.mxu0 0.0
    %648 = vmatpush1.msra.mxu0 0.0
    %649 = vmatprep.subr.mxu0 0.0
    %650 = vmatpush1.msra.mxu0 0.0
    %651 = vmatprep.mubr.f32.mxu0 0.0
    %652 = vmatmul.mubr.f32.gmra.mrb[0].mxu0 %v580
    %v653 = vpop.f32.mrb[0].mxu0
    %v654 = vadd.f32 %v585, %v653
    %v655 = vpop.f32.mrb[0].mxu0
    %656 = vdwg.mxu0
    %v657 = vadd.f32 %v90, %v654
    %v658 = vadd.f32 %v91, %v654
    %v659 = vld [vmem:[%s22] sm:$0x1]
    %v660 = vld [vmem:[%s23] sm:$0x1]
    %v661 = vsel %vm157, %v657, 0.0
    %662 = vadd.xlane.f32.xlu0 %v661
    %v663 = vpop.xlane.xlu0 %662
    %v664 = vsel %vm157, %v658, 0.0
    %665 = vadd.xlane.f32.xlu0 %v664
    %v666 = vpop.xlane.xlu0 %665
    %v667 = vrcp.pop 32.0
    %v668 = vmul.f32 %v663, %v667
    %v669 = vmul.f32 %v666, %v667
    %v670 = vsub.f32 %v657, %v668
    %v671 = vsub.f32 %v658, %v669
    %v672 = vmul.f32 %v670, %v670
    %v673 = vmul.f32 %v671, %v671
    %v674 = vsel %vm157, %v672, 0.0
    %675 = vadd.xlane.f32.xlu0 %v674
    %v676 = vpop.xlane.xlu0 %675
    %v677 = vsel %vm157, %v673, 0.0
    %678 = vadd.xlane.f32.xlu0 %v677
    %v679 = vpop.xlane.xlu0 %678
    %v680 = vmul.f32 %v676, %v667
    %v681 = vmul.f32 %v679, %v667
    %v682 = vadd.f32 %v680, 1e-05
    %v683 = vadd.f32 %v681, 1e-05
    %v684 = vrsqrt.pop %v682
    %v685 = vrsqrt.pop %v683
    %v686 = vmul.f32 %v670, %v684
    %v687 = vmul.f32 %v671, %v685
    %v689 = vlaneseq
    %v690 = vshrl.u32 %v689, 7
    %v691 = vsub.s32 0, %v690
    %v692 = vrot.slane %v659, %v691
    %v694 = vmul.f32 %v686, %v692
    %v695 = vmul.f32 %v687, %v692
    %v697 = vlaneseq
    %v698 = vshrl.u32 %v697, 7
    %v699 = vsub.s32 0, %v698
    %v700 = vrot.slane %v660, %v699
    %v702 = vadd.f32 %v694, %v700
    %v703 = vadd.f32 %v695, %v700
    %v704 = vld [vmem:[%s8] sm:$0xff]
    %v705 = vld [vmem:[%s8 + $0x8] sm:$0xff]
    %v706 = vld [vmem:[%s8 + $0x10] sm:$0xff]
    %v707 = vld [vmem:[%s8 + $0x18] sm:$0xff]
    %v708 = vld [vmem:[%s9] sm:$0x1]
    %v710 = vlaneseq
    %v711 = vshrl.u32 %v710, 7
    %v712 = vsub.s32 0, %v711
    %v713 = vrot.slane %v708, %v712
    %v716 = vsel %vm157, %v702, 0
    %718 = vmatprep.subr.mxu0 0.0
    %719 = vmatpush1.msra.mxu0 %v704
    %720 = vmatprep.subr.mxu0 0.0
    %721 = vmatpush1.msra.mxu0 %v705
    %722 = vmatprep.subr.mxu0 0.0
    %723 = vmatpush1.msra.mxu0 %v706
    %724 = vmatprep.subr.mxu0 0.0
    %725 = vmatpush1.msra.mxu0 %v707
    %726 = vmatprep.subr.mxu0 0.0
    %727 = vmatpush1.msra.mxu0 0.0
    %728 = vmatprep.subr.mxu0 0.0
    %729 = vmatpush1.msra.mxu0 0.0
    %730 = vmatprep.subr.mxu0 0.0
    %731 = vmatpush1.msra.mxu0 0.0
    %732 = vmatprep.subr.mxu0 0.0
    %733 = vmatpush1.msra.mxu0 0.0
    %734 = vmatprep.subr.mxu0 0.0
    %735 = vmatpush1.msra.mxu0 0.0
    %736 = vmatprep.subr.mxu0 0.0
    %737 = vmatpush1.msra.mxu0 0.0
    %738 = vmatprep.subr.mxu0 0.0
    %739 = vmatpush1.msra.mxu0 0.0
    %740 = vmatprep.subr.mxu0 0.0
    %741 = vmatpush1.msra.mxu0 0.0
    %742 = vmatprep.subr.mxu0 0.0
    %743 = vmatpush1.msra.mxu0 0.0
    %744 = vmatprep.subr.mxu0 0.0
    %745 = vmatpush1.msra.mxu0 0.0
    %746 = vmatprep.subr.mxu0 0.0
    %747 = vmatpush1.msra.mxu0 0.0
    %748 = vmatprep.subr.mxu0 0.0
    %749 = vmatpush1.msra.mxu0 0.0
    %750 = vmatprep.subr.mxu0 0.0
    %751 = vmatpush1.msra.mxu0 0.0
    %752 = vmatprep.subr.mxu0 0.0
    %753 = vmatpush1.msra.mxu0 0.0
    %754 = vmatprep.subr.mxu0 0.0
    %755 = vmatpush1.msra.mxu0 0.0
    %756 = vmatprep.subr.mxu0 0.0
    %757 = vmatpush1.msra.mxu0 0.0
    %758 = vmatprep.subr.mxu0 0.0
    %759 = vmatpush1.msra.mxu0 0.0
    %760 = vmatprep.subr.mxu0 0.0
    %761 = vmatpush1.msra.mxu0 0.0
    %762 = vmatprep.subr.mxu0 0.0
    %763 = vmatpush1.msra.mxu0 0.0
    %764 = vmatprep.subr.mxu0 0.0
    %765 = vmatpush1.msra.mxu0 0.0
    %766 = vmatprep.subr.mxu0 0.0
    %767 = vmatpush1.msra.mxu0 0.0
    %768 = vmatprep.subr.mxu0 0.0
    %769 = vmatpush1.msra.mxu0 0.0
    %770 = vmatprep.subr.mxu0 0.0
    %771 = vmatpush1.msra.mxu0 0.0
    %772 = vmatprep.subr.mxu0 0.0
    %773 = vmatpush1.msra.mxu0 0.0
    %774 = vmatprep.subr.mxu0 0.0
    %775 = vmatpush1.msra.mxu0 0.0
    %776 = vmatprep.subr.mxu0 0.0
    %777 = vmatpush1.msra.mxu0 0.0
    %778 = vmatprep.subr.mxu0 0.0
    %779 = vmatpush1.msra.mxu0 0.0
    %780 = vmatprep.subr.mxu0 0.0
    %781 = vmatpush1.msra.mxu0 0.0
    %782 = vmatprep.mubr.f32.mxu0 0.0
    %783 = vmatmul.mubr.f32.gmra.mrb[0].mxu0 %v716
    %v784 = vpop.f32.mrb[0].mxu0
    %v785 = vadd.f32 %v713, %v784
    %v786 = vpop.f32.mrb[0].mxu0
    %787 = vdwg.mxu0
    %v788 = vld [vmem:[%s10] sm:$0xff]
    %v789 = vld [vmem:[%s10 + $0x8] sm:$0xff]
    %v790 = vld [vmem:[%s10 + $0x10] sm:$0xff]
    %v791 = vld [vmem:[%s10 + $0x18] sm:$0xff]
    %v792 = vld [vmem:[%s10 + $0x20] sm:$0xff]
    %v793 = vld [vmem:[%s10 + $0x28] sm:$0xff]
    %v794 = vld [vmem:[%s10 + $0x30] sm:$0xff]
    %v795 = vld [vmem:[%s10 + $0x38] sm:$0xff]
    %v796 = vld [vmem:[%s11] sm:$0x3]
    %v798 = vlaneseq
    %v799 = vshrl.u32 %v798, 7
    %v800 = vsub.s32 0, %v799
    %v801 = vrot.slane %v796, %v800
    %v802 = vlaneseq
    %v803 = vshrl.u32 %v802, 7
    %v804 = vsub.s32 1, %v803
    %v805 = vrot.slane %v796, %v804
    %v809 = vsel %vm157, %v92, 0
    %811 = vmatprep.subr.mxu0 %v789
    %812 = vmatpush1.msra.mxu0 %v788
    %813 = vmatprep.subr.mxu0 %v791
    %814 = vmatpush1.msra.mxu0 %v790
    %815 = vmatprep.subr.mxu0 %v793
    %816 = vmatpush1.msra.mxu0 %v792
    %817 = vmatprep.subr.mxu0 %v795
    %818 = vmatpush1.msra.mxu0 %v794
    %819 = vmatprep.subr.mxu0 0.0
    %820 = vmatpush1.msra.mxu0 0.0
    %821 = vmatprep.subr.mxu0 0.0
    %822 = vmatpush1.msra.mxu0 0.0
    %823 = vmatprep.subr.mxu0 0.0
    %824 = vmatpush1.msra.mxu0 0.0
    %825 = vmatprep.subr.mxu0 0.0
    %826 = vmatpush1.msra.mxu0 0.0
    %827 = vmatprep.subr.mxu0 0.0
    %828 = vmatpush1.msra.mxu0 0.0
    %829 = vmatprep.subr.mxu0 0.0
    %830 = vmatpush1.msra.mxu0 0.0
    %831 = vmatprep.subr.mxu0 0.0
    %832 = vmatpush1.msra.mxu0 0.0
    %833 = vmatprep.subr.mxu0 0.0
    %834 = vmatpush1.msra.mxu0 0.0
    %835 = vmatprep.subr.mxu0 0.0
    %836 = vmatpush1.msra.mxu0 0.0
    %837 = vmatprep.subr.mxu0 0.0
    %838 = vmatpush1.msra.mxu0 0.0
    %839 = vmatprep.subr.mxu0 0.0
    %840 = vmatpush1.msra.mxu0 0.0
    %841 = vmatprep.subr.mxu0 0.0
    %842 = vmatpush1.msra.mxu0 0.0
    %843 = vmatprep.subr.mxu0 0.0
    %844 = vmatpush1.msra.mxu0 0.0
    %845 = vmatprep.subr.mxu0 0.0
    %846 = vmatpush1.msra.mxu0 0.0
    %847 = vmatprep.subr.mxu0 0.0
    %848 = vmatpush1.msra.mxu0 0.0
    %849 = vmatprep.subr.mxu0 0.0
    %850 = vmatpush1.msra.mxu0 0.0
    %851 = vmatprep.subr.mxu0 0.0
    %852 = vmatpush1.msra.mxu0 0.0
    %853 = vmatprep.subr.mxu0 0.0
    %854 = vmatpush1.msra.mxu0 0.0
    %855 = vmatprep.subr.mxu0 0.0
    %856 = vmatpush1.msra.mxu0 0.0
    %857 = vmatprep.subr.mxu0 0.0
    %858 = vmatpush1.msra.mxu0 0.0
    %859 = vmatprep.subr.mxu0 0.0
    %860 = vmatpush1.msra.mxu0 0.0
    %861 = vmatprep.subr.mxu0 0.0
    %862 = vmatpush1.msra.mxu0 0.0
    %863 = vmatprep.subr.mxu0 0.0
    %864 = vmatpush1.msra.mxu0 0.0
    %865 = vmatprep.subr.mxu0 0.0
    %866 = vmatpush1.msra.mxu0 0.0
    %867 = vmatprep.subr.mxu0 0.0
    %868 = vmatpush1.msra.mxu0 0.0
    %869 = vmatprep.subr.mxu0 0.0
    %870 = vmatpush1.msra.mxu0 0.0
    %871 = vmatprep.subr.mxu0 0.0
    %872 = vmatpush1.msra.mxu0 0.0
    %873 = vmatprep.subr.mxu0 0.0
    %874 = vmatpush1.msra.mxu0 0.0
    %875 = vmatprep.mubr.f32.mxu0 0.0
    %876 = vmatmul.mubr.f32.gmra.mrb[0].mxu0 %v809
    %v877 = vpop.f32.mrb[0].mxu0
    %v878 = vadd.f32 %v801, %v877
    %v879 = vpop.f32.mrb[0].mxu0
    %v880 = vadd.f32 %v805, %v879
    %881 = vdwg.mxu0
    %v882 = vld [vmem:[%s3] sm:$0x1]
    %v883 = vld [vmem:[%s12] sm:$0xff]
    %v884 = vld [vmem:[%s12 + $0x8] sm:$0xff]
    %v885 = vld [vmem:[%s12 + $0x10] sm:$0xff]
    %v886 = vld [vmem:[%s12 + $0x18] sm:$0xff]
    %v887 = vld [vmem:[%s12 + $0x20] sm:$0xff]
    %v888 = vld [vmem:[%s12 + $0x28] sm:$0xff]
    %v889 = vld [vmem:[%s12 + $0x30] sm:$0xff]
    %v890 = vld [vmem:[%s12 + $0x38] sm:$0xff]
    %v891 = vld [vmem:[%s12 + $0x40] sm:$0xff]
    %v892 = vld [vmem:[%s12 + $0x48] sm:$0xff]
    %v893 = vld [vmem:[%s12 + $0x50] sm:$0xff]
    %v894 = vld [vmem:[%s12 + $0x58] sm:$0xff]
    %v895 = vld [vmem:[%s12 + $0x60] sm:$0xff]
    %v896 = vld [vmem:[%s12 + $0x68] sm:$0xff]
    %v897 = vld [vmem:[%s12 + $0x70] sm:$0xff]
    %v898 = vld [vmem:[%s12 + $0x78] sm:$0xff]
    %v899 = vld [vmem:[%s13] sm:$0x1]
    %v900 = vmul.f32 %v785, %v878
    %901 = vmatprep.subr.mxu0 0.0
    %902 = vmatpush1.msra.mxu0 %v93
    %903 = vmatprep.subr.mxu0 0.0
    %904 = vmatpush1.msra.mxu0 %v94
    %905 = vmatprep.subr.mxu0 0.0
    %906 = vmatpush1.msra.mxu0 %v95
    %907 = vmatprep.subr.mxu0 0.0
    %908 = vmatpush1.msra.mxu0 %v96
    %909 = vmatprep.subr.mxu0 0.0
    %910 = vmatpush1.msra.mxu0 %v97
    %911 = vmatprep.subr.mxu0 0.0
    %912 = vmatpush1.msra.mxu0 %v98
    %913 = vmatprep.subr.mxu0 0.0
    %914 = vmatpush1.msra.mxu0 %v99
    %915 = vmatprep.subr.mxu0 0.0
    %916 = vmatpush1.msra.mxu0 %v100
    %917 = vmatprep.subr.mxu0 0.0
    %918 = vmatpush1.msra.mxu0 %v101
    %919 = vmatprep.subr.mxu0 0.0
    %920 = vmatpush1.msra.mxu0 %v102
    %921 = vmatprep.subr.mxu0 0.0
    %922 = vmatpush1.msra.mxu0 %v103
    %923 = vmatprep.subr.mxu0 0.0
    %924 = vmatpush1.msra.mxu0 %v104
    %925 = vmatprep.subr.mxu0 0.0
    %926 = vmatpush1.msra.mxu0 %v105
    %927 = vmatprep.subr.mxu0 0.0
    %928 = vmatpush1.msra.mxu0 %v106
    %929 = vmatprep.subr.mxu0 0.0
    %930 = vmatpush1.msra.mxu0 %v107
    %931 = vmatprep.subr.mxu0 0.0
    %932 = vmatpush1.msra.mxu0 %v108
    %933 = vmatprep.subr.mxu0 0.0
    %934 = vmatpush1.msra.mxu0 0.0
    %935 = vmatprep.subr.mxu0 0.0
    %936 = vmatpush1.msra.mxu0 0.0
    %937 = vmatprep.subr.mxu0 0.0
    %938 = vmatpush1.msra.mxu0 0.0
    %939 = vmatprep.subr.mxu0 0.0
    %940 = vmatpush1.msra.mxu0 0.0
    %941 = vmatprep.subr.mxu0 0.0
    %942 = vmatpush1.msra.mxu0 0.0
    %943 = vmatprep.subr.mxu0 0.0
    %944 = vmatpush1.msra.mxu0 0.0
    %945 = vmatprep.subr.mxu0 0.0
    %946 = vmatpush1.msra.mxu0 0.0
    %947 = vmatprep.subr.mxu0 0.0
    %948 = vmatpush1.msra.mxu0 0.0
    %949 = vmatprep.subr.mxu0 0.0
    %950 = vmatpush1.msra.mxu0 0.0
    %951 = vmatprep.subr.mxu0 0.0
    %952 = vmatpush1.msra.mxu0 0.0
    %953 = vmatprep.subr.mxu0 0.0
    %954 = vmatpush1.msra.mxu0 0.0
    %955 = vmatprep.subr.mxu0 0.0
    %956 = vmatpush1.msra.mxu0 0.0
    %957 = vmatprep.subr.mxu0 0.0
    %958 = vmatpush1.msra.mxu0 0.0
    %959 = vmatprep.subr.mxu0 0.0
    %960 = vmatpush1.msra.mxu0 0.0
    %961 = vmatprep.subr.mxu0 0.0
    %962 = vmatpush1.msra.mxu0 0.0
    %963 = vmatprep.subr.mxu0 0.0
    %964 = vmatpush1.msra.mxu0 0.0
    %965 = vmatprep.mubr.f32.mxu0 0.0
    %966 = vmatmul.mubr.f32.gmra.mrb[0].mxu0 %v900
    %v967 = vpop.f32.mrb[0].mxu0
    %v968 = vadd.f32 0.0, %v967
    %v969 = vpop.f32.mrb[0].mxu0
    %970 = vdwg.mxu0
    %v972 = vlaneseq
    %v973 = vshrl.u32 %v972, 7
    %v974 = vsub.s32 0, %v973
    %v975 = vrot.slane %v882, %v974
    %vm977 = vcmp.eq.f32.partialorder %v975, 0.0
    %v978 = vsel %vm977, -1e+09, %v968
    %v980 = vsel %vm399, %v978, 0
    %982 = vmatprep.subr.mxu0 0.0
    %983 = vmatpush1.msra.mxu0 %v109
    %984 = vmatprep.subr.mxu0 0.0
    %985 = vmatpush1.msra.mxu0 %v110
    %986 = vmatprep.subr.mxu0 0.0
    %987 = vmatpush1.msra.mxu0 0.0
    %988 = vmatprep.subr.mxu0 0.0
    %989 = vmatpush1.msra.mxu0 0.0
    %990 = vmatprep.subr.mxu0 0.0
    %991 = vmatpush1.msra.mxu0 0.0
    %992 = vmatprep.subr.mxu0 0.0
    %993 = vmatpush1.msra.mxu0 0.0
    %994 = vmatprep.subr.mxu0 0.0
    %995 = vmatpush1.msra.mxu0 0.0
    %996 = vmatprep.subr.mxu0 0.0
    %997 = vmatpush1.msra.mxu0 0.0
    %998 = vmatprep.subr.mxu0 0.0
    %999 = vmatpush1.msra.mxu0 0.0
    %1000 = vmatprep.subr.mxu0 0.0
    %1001 = vmatpush1.msra.mxu0 0.0
    %1002 = vmatprep.subr.mxu0 0.0
    %1003 = vmatpush1.msra.mxu0 0.0
    %1004 = vmatprep.subr.mxu0 0.0
    %1005 = vmatpush1.msra.mxu0 0.0
    %1006 = vmatprep.subr.mxu0 0.0
    %1007 = vmatpush1.msra.mxu0 0.0
    %1008 = vmatprep.subr.mxu0 0.0
    %1009 = vmatpush1.msra.mxu0 0.0
    %1010 = vmatprep.subr.mxu0 0.0
    %1011 = vmatpush1.msra.mxu0 0.0
    %1012 = vmatprep.subr.mxu0 0.0
    %1013 = vmatpush1.msra.mxu0 0.0
    %1014 = vmatprep.subr.mxu0 0.0
    %1015 = vmatpush1.msra.mxu0 0.0
    %1016 = vmatprep.subr.mxu0 0.0
    %1017 = vmatpush1.msra.mxu0 0.0
    %1018 = vmatprep.subr.mxu0 0.0
    %1019 = vmatpush1.msra.mxu0 0.0
    %1020 = vmatprep.subr.mxu0 0.0
    %1021 = vmatpush1.msra.mxu0 0.0
    %1022 = vmatprep.subr.mxu0 0.0
    %1023 = vmatpush1.msra.mxu0 0.0
    %1024 = vmatprep.subr.mxu0 0.0
    %1025 = vmatpush1.msra.mxu0 0.0
    %1026 = vmatprep.subr.mxu0 0.0
    %1027 = vmatpush1.msra.mxu0 0.0
    %1028 = vmatprep.subr.mxu0 0.0
    %1029 = vmatpush1.msra.mxu0 0.0
    %1030 = vmatprep.subr.mxu0 0.0
    %1031 = vmatpush1.msra.mxu0 0.0
    %1032 = vmatprep.subr.mxu0 0.0
    %1033 = vmatpush1.msra.mxu0 0.0
    %1034 = vmatprep.subr.mxu0 0.0
    %1035 = vmatpush1.msra.mxu0 0.0
    %1036 = vmatprep.subr.mxu0 0.0
    %1037 = vmatpush1.msra.mxu0 0.0
    %1038 = vmatprep.subr.mxu0 0.0
    %1039 = vmatpush1.msra.mxu0 0.0
    %1040 = vmatprep.subr.mxu0 0.0
    %1041 = vmatpush1.msra.mxu0 0.0
    %1042 = vmatprep.subr.mxu0 0.0
    %1043 = vmatpush1.msra.mxu0 0.0
    %1044 = vmatprep.subr.mxu0 0.0
    %1045 = vmatpush1.msra.mxu0 0.0
    %1046 = vmatprep.mubr.f32.mxu0 0.0
    %1047 = vmatmul.mubr.f32.gmra.mrb[0].mxu0 %v980
    %v1048 = vpop.f32.mrb[0].mxu0
    %v1049 = vadd.f32 0.0, %v1048
    %v1050 = vpop.f32.mrb[0].mxu0
    %1051 = vdwg.mxu0
    %v1052 = vmul.f32 %v1049, %v880
    %1053 = vmatprep.subr.mxu0 0.0
    %1054 = vmatpush1.msra.mxu0 %v111
    %1055 = vmatprep.subr.mxu0 0.0
    %1056 = vmatpush1.msra.mxu0 %v112
    %1057 = vmatprep.subr.mxu0 0.0
    %1058 = vmatpush1.msra.mxu0 %v113
    %1059 = vmatprep.subr.mxu0 0.0
    %1060 = vmatpush1.msra.mxu0 %v114
    %1061 = vmatprep.subr.mxu0 0.0
    %1062 = vmatpush1.msra.mxu0 %v115
    %1063 = vmatprep.subr.mxu0 0.0
    %1064 = vmatpush1.msra.mxu0 %v116
    %1065 = vmatprep.subr.mxu0 0.0
    %1066 = vmatpush1.msra.mxu0 %v117
    %1067 = vmatprep.subr.mxu0 0.0
    %1068 = vmatpush1.msra.mxu0 %v118
    %1069 = vmatprep.subr.mxu0 0.0
    %1070 = vmatpush1.msra.mxu0 %v119
    %1071 = vmatprep.subr.mxu0 0.0
    %1072 = vmatpush1.msra.mxu0 %v120
    %1073 = vmatprep.subr.mxu0 0.0
    %1074 = vmatpush1.msra.mxu0 %v121
    %1075 = vmatprep.subr.mxu0 0.0
    %1076 = vmatpush1.msra.mxu0 %v122
    %1077 = vmatprep.subr.mxu0 0.0
    %1078 = vmatpush1.msra.mxu0 %v123
    %1079 = vmatprep.subr.mxu0 0.0
    %1080 = vmatpush1.msra.mxu0 %v124
    %1081 = vmatprep.subr.mxu0 0.0
    %1082 = vmatpush1.msra.mxu0 %v125
    %1083 = vmatprep.subr.mxu0 0.0
    %1084 = vmatpush1.msra.mxu0 %v126
    %1085 = vmatprep.subr.mxu0 0.0
    %1086 = vmatpush1.msra.mxu0 0.0
    %1087 = vmatprep.subr.mxu0 0.0
    %1088 = vmatpush1.msra.mxu0 0.0
    %1089 = vmatprep.subr.mxu0 0.0
    %1090 = vmatpush1.msra.mxu0 0.0
    %1091 = vmatprep.subr.mxu0 0.0
    %1092 = vmatpush1.msra.mxu0 0.0
    %1093 = vmatprep.subr.mxu0 0.0
    %1094 = vmatpush1.msra.mxu0 0.0
    %1095 = vmatprep.subr.mxu0 0.0
    %1096 = vmatpush1.msra.mxu0 0.0
    %1097 = vmatprep.subr.mxu0 0.0
    %1098 = vmatpush1.msra.mxu0 0.0
    %1099 = vmatprep.subr.mxu0 0.0
    %1100 = vmatpush1.msra.mxu0 0.0
    %1101 = vmatprep.subr.mxu0 0.0
    %1102 = vmatpush1.msra.mxu0 0.0
    %1103 = vmatprep.subr.mxu0 0.0
    %1104 = vmatpush1.msra.mxu0 0.0
    %1105 = vmatprep.subr.mxu0 0.0
    %1106 = vmatpush1.msra.mxu0 0.0
    %1107 = vmatprep.subr.mxu0 0.0
    %1108 = vmatpush1.msra.mxu0 0.0
    %1109 = vmatprep.subr.mxu0 0.0
    %1110 = vmatpush1.msra.mxu0 0.0
    %1111 = vmatprep.subr.mxu0 0.0
    %1112 = vmatpush1.msra.mxu0 0.0
    %1113 = vmatprep.subr.mxu0 0.0
    %1114 = vmatpush1.msra.mxu0 0.0
    %1115 = vmatprep.subr.mxu0 0.0
    %1116 = vmatpush1.msra.mxu0 0.0
    %1117 = vmatprep.mubr.f32.mxu0 0.0
    %1118 = vmatmul.mubr.f32.gmra.mrb[0].mxu0 %v1052
    %v1119 = vpop.f32.mrb[0].mxu0
    %v1120 = vadd.f32 0.0, %v1119
    %v1121 = vpop.f32.mrb[0].mxu0
    %1122 = vdwg.mxu0
    %v1124 = vrot.slane %v1120, 1
    %1125 = vrot.lane.b32.xlu0 %v1124, 32
    %v1126 = vpop.permute.xlu0 %1125
    %v1128 = vrot.slane %v1120, 2
    %1129 = vrot.lane.b32.xlu0 %v1128, 64
    %v1130 = vpop.permute.xlu0 %1129
    %v1132 = vrot.slane %v1120, 3
    %1133 = vrot.lane.b32.xlu0 %v1132, 96
    %v1134 = vpop.permute.xlu0 %1133
    %v1136 = vsel %vm157, %v1120, %v1126
    %v1137 = vsel %vm558, %v1136, %v1130
    %v1138 = vsel %vm560, %v1137, %v1134
    %v1140 = vrot.slane %v1138, 3
    %v1142 = vsel %vm565, %v1138, %v1140
    %v1144 = vrot.slane %v1142, 6
    %v1146 = vrot.slane %v1142, 4
    %v1148 = vrot.slane %v1142, 2
    %v1150 = vsel %vm574, %v1142, %v1144
    %v1151 = vsel %vm576, %v1150, %v1146
    %v1152 = vsel %vm578, %v1151, %v1148
    %v1153 = vmul.f32 %v1152, %v127
    %v1155 = vlaneseq
    %v1156 = vshrl.u32 %v1155, 7
    %v1157 = vsub.s32 0, %v1156
    %v1158 = vrot.slane %v899, %v1157
    %1160 = vmatprep.subr.mxu0 0.0
    %1161 = vmatpush1.msra.mxu0 %v883
    %1162 = vmatprep.subr.mxu0 0.0
    %1163 = vmatpush1.msra.mxu0 %v884
    %1164 = vmatprep.subr.mxu0 0.0
    %1165 = vmatpush1.msra.mxu0 %v885
    %1166 = vmatprep.subr.mxu0 0.0
    %1167 = vmatpush1.msra.mxu0 %v886
    %1168 = vmatprep.subr.mxu0 0.0
    %1169 = vmatpush1.msra.mxu0 %v887
    %1170 = vmatprep.subr.mxu0 0.0
    %1171 = vmatpush1.msra.mxu0 %v888
    %1172 = vmatprep.subr.mxu0 0.0
    %1173 = vmatpush1.msra.mxu0 %v889
    %1174 = vmatprep.subr.mxu0 0.0
    %1175 = vmatpush1.msra.mxu0 %v890
    %1176 = vmatprep.subr.mxu0 0.0
    %1177 = vmatpush1.msra.mxu0 %v891
    %1178 = vmatprep.subr.mxu0 0.0
    %1179 = vmatpush1.msra.mxu0 %v892
    %1180 = vmatprep.subr.mxu0 0.0
    %1181 = vmatpush1.msra.mxu0 %v893
    %1182 = vmatprep.subr.mxu0 0.0
    %1183 = vmatpush1.msra.mxu0 %v894
    %1184 = vmatprep.subr.mxu0 0.0
    %1185 = vmatpush1.msra.mxu0 %v895
    %1186 = vmatprep.subr.mxu0 0.0
    %1187 = vmatpush1.msra.mxu0 %v896
    %1188 = vmatprep.subr.mxu0 0.0
    %1189 = vmatpush1.msra.mxu0 %v897
    %1190 = vmatprep.subr.mxu0 0.0
    %1191 = vmatpush1.msra.mxu0 %v898
    %1192 = vmatprep.subr.mxu0 0.0
    %1193 = vmatpush1.msra.mxu0 0.0
    %1194 = vmatprep.subr.mxu0 0.0
    %1195 = vmatpush1.msra.mxu0 0.0
    %1196 = vmatprep.subr.mxu0 0.0
    %1197 = vmatpush1.msra.mxu0 0.0
    %1198 = vmatprep.subr.mxu0 0.0
    %1199 = vmatpush1.msra.mxu0 0.0
    %1200 = vmatprep.subr.mxu0 0.0
    %1201 = vmatpush1.msra.mxu0 0.0
    %1202 = vmatprep.subr.mxu0 0.0
    %1203 = vmatpush1.msra.mxu0 0.0
    %1204 = vmatprep.subr.mxu0 0.0
    %1205 = vmatpush1.msra.mxu0 0.0
    %1206 = vmatprep.subr.mxu0 0.0
    %1207 = vmatpush1.msra.mxu0 0.0
    %1208 = vmatprep.subr.mxu0 0.0
    %1209 = vmatpush1.msra.mxu0 0.0
    %1210 = vmatprep.subr.mxu0 0.0
    %1211 = vmatpush1.msra.mxu0 0.0
    %1212 = vmatprep.subr.mxu0 0.0
    %1213 = vmatpush1.msra.mxu0 0.0
    %1214 = vmatprep.subr.mxu0 0.0
    %1215 = vmatpush1.msra.mxu0 0.0
    %1216 = vmatprep.subr.mxu0 0.0
    %1217 = vmatpush1.msra.mxu0 0.0
    %1218 = vmatprep.subr.mxu0 0.0
    %1219 = vmatpush1.msra.mxu0 0.0
    %1220 = vmatprep.subr.mxu0 0.0
    %1221 = vmatpush1.msra.mxu0 0.0
    %1222 = vmatprep.subr.mxu0 0.0
    %1223 = vmatpush1.msra.mxu0 0.0
    %1224 = vmatprep.mubr.f32.mxu0 0.0
    %1225 = vmatmul.mubr.f32.gmra.mrb[0].mxu0 %v1153
    %v1226 = vpop.f32.mrb[0].mxu0
    %v1227 = vadd.f32 %v1158, %v1226
    %v1228 = vpop.f32.mrb[0].mxu0
    %1229 = vdwg.mxu0
    %v1230 = vadd.f32 %v702, %v1227
    %v1231 = vadd.f32 %v703, %v1227
    %v1232 = vld [vmem:[%s24] sm:$0x1]
    %v1233 = vld [vmem:[%s25] sm:$0x1]
    %v1234 = vsel %vm157, %v1230, 0.0
    %1235 = vadd.xlane.f32.xlu0 %v1234
    %v1236 = vpop.xlane.xlu0 %1235
    %v1237 = vsel %vm157, %v1231, 0.0
    %1238 = vadd.xlane.f32.xlu0 %v1237
    %v1239 = vpop.xlane.xlu0 %1238
    %v1240 = vmul.f32 %v1236, %v667
    %v1241 = vmul.f32 %v1239, %v667
    %v1242 = vsub.f32 %v1230, %v1240
    %v1243 = vsub.f32 %v1231, %v1241
    %v1244 = vmul.f32 %v1242, %v1242
    %v1245 = vmul.f32 %v1243, %v1243
    %v1246 = vsel %vm157, %v1244, 0.0
    %1247 = vadd.xlane.f32.xlu0 %v1246
    %v1248 = vpop.xlane.xlu0 %1247
    %v1249 = vsel %vm157, %v1245, 0.0
    %1250 = vadd.xlane.f32.xlu0 %v1249
    %v1251 = vpop.xlane.xlu0 %1250
    %v1252 = vmul.f32 %v1248, %v667
    %v1253 = vmul.f32 %v1251, %v667
    %v1254 = vadd.f32 %v1252, 1e-05
    %v1255 = vadd.f32 %v1253, 1e-05
    %v1256 = vrsqrt.pop %v1254
    %v1257 = vrsqrt.pop %v1255
    %v1258 = vmul.f32 %v1242, %v1256
    %v1259 = vmul.f32 %v1243, %v1257
    %v1261 = vlaneseq
    %v1262 = vshrl.u32 %v1261, 7
    %v1263 = vsub.s32 0, %v1262
    %v1264 = vrot.slane %v1232, %v1263
    %v1266 = vmul.f32 %v1258, %v1264
    %v1267 = vmul.f32 %v1259, %v1264
    %v1269 = vlaneseq
    %v1270 = vshrl.u32 %v1269, 7
    %v1271 = vsub.s32 0, %v1270
    %v1272 = vrot.slane %v1233, %v1271
    %v1274 = vadd.f32 %v1266, %v1272
    %v1275 = vadd.f32 %v1267, %v1272
    %v1276 = vld [vmem:[%s18] sm:$0xff]
    %v1277 = vld [vmem:[%s18 + $0x8] sm:$0xff]
    %v1278 = vld [vmem:[%s18 + $0x10] sm:$0xff]
    %v1279 = vld [vmem:[%s18 + $0x18] sm:$0xff]
    %v1280 = vld [vmem:[%s19] sm:$0x1]
    %v1282 = vlaneseq
    %v1283 = vshrl.u32 %v1282, 7
    %v1284 = vsub.s32 0, %v1283
    %v1285 = vrot.slane %v1280, %v1284
    %v1288 = vsel %vm157, %v1274, 0
    %v1291 = vsel %vm157, %v1275, 0
    %1293 = vmatprep.subr.mxu0 0.0
    %1294 = vmatpush1.msra.mxu0 %v1276
    %1295 = vmatprep.subr.mxu0 0.0
    %1296 = vmatpush1.msra.mxu0 %v1277
    %1297 = vmatprep.subr.mxu0 0.0
    %1298 = vmatpush1.msra.mxu0 %v1278
    %1299 = vmatprep.subr.mxu0 0.0
    %1300 = vmatpush1.msra.mxu0 %v1279
    %1301 = vmatprep.subr.mxu0 0.0
    %1302 = vmatpush1.msra.mxu0 0.0
    %1303 = vmatprep.subr.mxu0 0.0
    %1304 = vmatpush1.msra.mxu0 0.0
    %1305 = vmatprep.subr.mxu0 0.0
    %1306 = vmatpush1.msra.mxu0 0.0
    %1307 = vmatprep.subr.mxu0 0.0
    %1308 = vmatpush1.msra.mxu0 0.0
    %1309 = vmatprep.subr.mxu0 0.0
    %1310 = vmatpush1.msra.mxu0 0.0
    %1311 = vmatprep.subr.mxu0 0.0
    %1312 = vmatpush1.msra.mxu0 0.0
    %1313 = vmatprep.subr.mxu0 0.0
    %1314 = vmatpush1.msra.mxu0 0.0
    %1315 = vmatprep.subr.mxu0 0.0
    %1316 = vmatpush1.msra.mxu0 0.0
    %1317 = vmatprep.subr.mxu0 0.0
    %1318 = vmatpush1.msra.mxu0 0.0
    %1319 = vmatprep.subr.mxu0 0.0
    %1320 = vmatpush1.msra.mxu0 0.0
    %1321 = vmatprep.subr.mxu0 0.0
    %1322 = vmatpush1.msra.mxu0 0.0
    %1323 = vmatprep.subr.mxu0 0.0
    %1324 = vmatpush1.msra.mxu0 0.0
    %1325 = vmatprep.subr.mxu0 0.0
    %1326 = vmatpush1.msra.mxu0 0.0
    %1327 = vmatprep.subr.mxu0 0.0
    %1328 = vmatpush1.msra.mxu0 0.0
    %1329 = vmatprep.subr.mxu0 0.0
    %1330 = vmatpush1.msra.mxu0 0.0
    %1331 = vmatprep.subr.mxu0 0.0
    %1332 = vmatpush1.msra.mxu0 0.0
    %1333 = vmatprep.subr.mxu0 0.0
    %1334 = vmatpush1.msra.mxu0 0.0
    %1335 = vmatprep.subr.mxu0 0.0
    %1336 = vmatpush1.msra.mxu0 0.0
    %1337 = vmatprep.subr.mxu0 0.0
    %1338 = vmatpush1.msra.mxu0 0.0
    %1339 = vmatprep.subr.mxu0 0.0
    %1340 = vmatpush1.msra.mxu0 0.0
    %1341 = vmatprep.subr.mxu0 0.0
    %1342 = vmatpush1.msra.mxu0 0.0
    %1343 = vmatprep.subr.mxu0 0.0
    %1344 = vmatpush1.msra.mxu0 0.0
    %1345 = vmatprep.subr.mxu0 0.0
    %1346 = vmatpush1.msra.mxu0 0.0
    %1347 = vmatprep.subr.mxu0 0.0
    %1348 = vmatpush1.msra.mxu0 0.0
    %1349 = vmatprep.subr.mxu0 0.0
    %1350 = vmatpush1.msra.mxu0 0.0
    %1351 = vmatprep.subr.mxu0 0.0
    %1352 = vmatpush1.msra.mxu0 0.0
    %1353 = vmatprep.subr.mxu0 0.0
    %1354 = vmatpush1.msra.mxu0 0.0
    %1355 = vmatprep.subr.mxu0 0.0
    %1356 = vmatpush1.msra.mxu0 0.0
    %1357 = vmatprep.mubr.f32.mxu0 0.0
    %1358 = vmatmul.mubr.f32.gmra.mrb[0].mxu0 %v1288
    %v1359 = vpop.f32.mrb[0].mxu0
    %v1360 = vadd.f32 %v1285, %v1359
    %v1361 = vpop.f32.mrb[0].mxu0
    %1362 = vmatprep.mubr.f32.mxu0 0.0
    %1363 = vmatmul.mubr.f32.gmra.mrb[0].mxu0 %v1291
    %v1364 = vpop.f32.mrb[0].mxu0
    %v1365 = vadd.f32 %v1285, %v1364
    %v1366 = vpop.f32.mrb[0].mxu0
    %1367 = vdwg.mxu0
    %v1368 = vmax.f32 %v1360, 0.0
    %v1369 = vmax.f32 %v1365, 0.0
    %v1370 = vld [vmem:[%s20] sm:$0xff]
    %v1371 = vld [vmem:[%s20 + $0x8] sm:$0xff]
    %v1372 = vld [vmem:[%s20 + $0x10] sm:$0xff]
    %v1373 = vld [vmem:[%s20 + $0x18] sm:$0xff]
    %v1374 = vld [vmem:[%s20 + $0x20] sm:$0xff]
    %v1375 = vld [vmem:[%s20 + $0x28] sm:$0xff]
    %v1376 = vld [vmem:[%s20 + $0x30] sm:$0xff]
    %v1377 = vld [vmem:[%s20 + $0x38] sm:$0xff]
    %v1378 = vld [vmem:[%s21] sm:$0x1]
    %v1380 = vlaneseq
    %v1381 = vshrl.u32 %v1380, 7
    %v1382 = vsub.s32 0, %v1381
    %v1383 = vrot.slane %v1378, %v1382
    %v1386 = vsel %vm558, %v1368, 0
    %v1389 = vsel %vm558, %v1369, 0
    %1391 = vmatprep.subr.mxu0 0.0
    %1392 = vmatpush1.msra.mxu0 %v1370
    %1393 = vmatprep.subr.mxu0 0.0
    %1394 = vmatpush1.msra.mxu0 %v1371
    %1395 = vmatprep.subr.mxu0 0.0
    %1396 = vmatpush1.msra.mxu0 %v1372
    %1397 = vmatprep.subr.mxu0 0.0
    %1398 = vmatpush1.msra.mxu0 %v1373
    %1399 = vmatprep.subr.mxu0 0.0
    %1400 = vmatpush1.msra.mxu0 %v1374
    %1401 = vmatprep.subr.mxu0 0.0
    %1402 = vmatpush1.msra.mxu0 %v1375
    %1403 = vmatprep.subr.mxu0 0.0
    %1404 = vmatpush1.msra.mxu0 %v1376
    %1405 = vmatprep.subr.mxu0 0.0
    %1406 = vmatpush1.msra.mxu0 %v1377
    %1407 = vmatprep.subr.mxu0 0.0
    %1408 = vmatpush1.msra.mxu0 0.0
    %1409 = vmatprep.subr.mxu0 0.0
    %1410 = vmatpush1.msra.mxu0 0.0
    %1411 = vmatprep.subr.mxu0 0.0
    %1412 = vmatpush1.msra.mxu0 0.0
    %1413 = vmatprep.subr.mxu0 0.0
    %1414 = vmatpush1.msra.mxu0 0.0
    %1415 = vmatprep.subr.mxu0 0.0
    %1416 = vmatpush1.msra.mxu0 0.0
    %1417 = vmatprep.subr.mxu0 0.0
    %1418 = vmatpush1.msra.mxu0 0.0
    %1419 = vmatprep.subr.mxu0 0.0
    %1420 = vmatpush1.msra.mxu0 0.0
    %1421 = vmatprep.subr.mxu0 0.0
    %1422 = vmatpush1.msra.mxu0 0.0
    %1423 = vmatprep.subr.mxu0 0.0
    %1424 = vmatpush1.msra.mxu0 0.0
    %1425 = vmatprep.subr.mxu0 0.0
    %1426 = vmatpush1.msra.mxu0 0.0
    %1427 = vmatprep.subr.mxu0 0.0
    %1428 = vmatpush1.msra.mxu0 0.0
    %1429 = vmatprep.subr.mxu0 0.0
    %1430 = vmatpush1.msra.mxu0 0.0
    %1431 = vmatprep.subr.mxu0 0.0
    %1432 = vmatpush1.msra.mxu0 0.0
    %1433 = vmatprep.subr.mxu0 0.0
    %1434 = vmatpush1.msra.mxu0 0.0
    %1435 = vmatprep.subr.mxu0 0.0
    %1436 = vmatpush1.msra.mxu0 0.0
    %1437 = vmatprep.subr.mxu0 0.0
    %1438 = vmatpush1.msra.mxu0 0.0
    %1439 = vmatprep.subr.mxu0 0.0
    %1440 = vmatpush1.msra.mxu0 0.0
    %1441 = vmatprep.subr.mxu0 0.0
    %1442 = vmatpush1.msra.mxu0 0.0
    %1443 = vmatprep.subr.mxu0 0.0
    %1444 = vmatpush1.msra.mxu0 0.0
    %1445 = vmatprep.subr.mxu0 0.0
    %1446 = vmatpush1.msra.mxu0 0.0
    %1447 = vmatprep.subr.mxu0 0.0
    %1448 = vmatpush1.msra.mxu0 0.0
    %1449 = vmatprep.subr.mxu0 0.0
    %1450 = vmatpush1.msra.mxu0 0.0
    %1451 = vmatprep.subr.mxu0 0.0
    %1452 = vmatpush1.msra.mxu0 0.0
    %1453 = vmatprep.subr.mxu0 0.0
    %1454 = vmatpush1.msra.mxu0 0.0
    %1455 = vmatprep.mubr.f32.mxu0 0.0
    %1456 = vmatmul.mubr.f32.gmra.mrb[0].mxu0 %v1386
    %v1457 = vpop.f32.mrb[0].mxu0
    %v1458 = vadd.f32 %v1383, %v1457
    %v1459 = vpop.f32.mrb[0].mxu0
    %1460 = vmatprep.mubr.f32.mxu0 0.0
    %1461 = vmatmul.mubr.f32.gmra.mrb[0].mxu0 %v1389
    %v1462 = vpop.f32.mrb[0].mxu0
    %v1463 = vadd.f32 %v1383, %v1462
    %v1464 = vpop.f32.mrb[0].mxu0
    %1465 = vdwg.mxu0
    %v1466 = vadd.f32 %v1274, %v1458
    %v1467 = vadd.f32 %v1275, %v1463
    %v1468 = vld [vmem:[%s26] sm:$0x1]
    %v1469 = vld [vmem:[%s27] sm:$0x1]
    %v1470 = vsel %vm157, %v1466, 0.0
    %1471 = vadd.xlane.f32.xlu0 %v1470
    %v1472 = vpop.xlane.xlu0 %1471
    %v1473 = vsel %vm157, %v1467, 0.0
    %1474 = vadd.xlane.f32.xlu0 %v1473
    %v1475 = vpop.xlane.xlu0 %1474
    %v1476 = vmul.f32 %v1472, %v667
    %v1477 = vmul.f32 %v1475, %v667
    %v1478 = vsub.f32 %v1466, %v1476
    %v1479 = vsub.f32 %v1467, %v1477
    %v1480 = vmul.f32 %v1478, %v1478
    %v1481 = vmul.f32 %v1479, %v1479
    %v1482 = vsel %vm157, %v1480, 0.0
    %1483 = vadd.xlane.f32.xlu0 %v1482
    %v1484 = vpop.xlane.xlu0 %1483
    %v1485 = vsel %vm157, %v1481, 0.0
    %1486 = vadd.xlane.f32.xlu0 %v1485
    %v1487 = vpop.xlane.xlu0 %1486
    %v1488 = vmul.f32 %v1484, %v667
    %v1489 = vmul.f32 %v1487, %v667
    %v1490 = vadd.f32 %v1488, 1e-05
    %v1491 = vadd.f32 %v1489, 1e-05
    %v1492 = vrsqrt.pop %v1490
    %v1493 = vrsqrt.pop %v1491
    %v1494 = vmul.f32 %v1478, %v1492
    %v1495 = vmul.f32 %v1479, %v1493
    %v1497 = vlaneseq
    %v1498 = vshrl.u32 %v1497, 7
    %v1499 = vsub.s32 0, %v1498
    %v1500 = vrot.slane %v1468, %v1499
    %v1502 = vmul.f32 %v1494, %v1500
    %v1503 = vmul.f32 %v1495, %v1500
    %v1505 = vlaneseq
    %v1506 = vshrl.u32 %v1505, 7
    %v1507 = vsub.s32 0, %v1506
    %v1508 = vrot.slane %v1469, %v1507
    %v1510 = vadd.f32 %v1502, %v1508
    %v1511 = vadd.f32 %v1503, %v1508
    %1512 = vst.msk [vmem:[#allocation2] sm:$0xff] %vm157, %v1510
    %1513 = vst.msk [vmem:[#allocation2 + $0x8] sm:$0xff] %vm157, %v1511
    // Predicated region
    $region114: #{decoder_layer.1} parent=1 // pred_check
      _
    $region115: #{decoder_layer.1} parent=1 // pred_check_branch
      %1515 = sbr.rel (0) target = $region117
    $region116: #{decoder_layer.1} parent=1 // pred_region
      %s1517 = ssub.s32 256, 256
      %1518 = vsyncadd [#allocation3], %s1517
      %s1519 = sshll.u32 [#allocation2], 4
      %s1520 = int_to_ptr.vmem [resolvable:$true] %s1519
      %1525 = dma.vmem_to_hbm [thread:$0]  %s1520, 256, %s28, [#allocation3], 128, 128, 8
    $region117: #{decoder_layer.1} parent=1 // pred_fallthru
      _
    // Predicated region
    $region118: #{decoder_layer.1} parent=1 // pred_check
      _
    $region119: #{decoder_layer.1} parent=1 // pred_check_branch
      %1527 = sbr.rel (0) target = $region121
    $region120: #{decoder_layer.1} parent=1 // pred_region
      %1528 = dma.done [#allocation3], 256
    $region121: #{decoder_layer.1} parent=1 // pred_fallthru
      _
    %1529 = vsyncpa [#allocation3], 1

</llo_original>
